<compile_context>
chip_gen: v6e
topology: v6e:2x2x1
jax: 0.10.0
libtpu: 0.0.40
codegen_flags: <defaults>
</compile_context>

<pallas_src>
import functools

import jax
import jax.numpy as jnp
from jax.experimental import pallas as pl
from jax.experimental.pallas import tpu as pltpu


def _slstm_fused_kernel(x_ref, wih_ref, whh_ref, b_ref, y_ref,
                        gx_scr, hseq_scr, *, batch, skip):
    """Fused multi-layer LSTM + skip, fully VMEM resident.

    x_ref   : (T*Bp, 4H) time-major input; channels at lane block [H, 2H), rest 0
    wih_ref : (L, 4H, 4H) rows [H, 2H) hold W_ih^T (PyTorch gate cols i,f,g,o)
    whh_ref : (L, 4H, 4H) rows [H, 2H) hold W_hh^T
    b_ref   : (L, 1, 4H)  b_ih + b_hh
    y_ref   : (T*Bp, 4H)  output slab (valid data at lane block [H, 2H))
    gx_scr  : (T*Bp, 4H)  hoisted input-projection gates (per layer)
    hseq_scr: (T*Bp, 4H)  per-layer h sequence (h valid at lane blocks 1 and 3)

    Padded batch rows and the "junk" lane blocks (0, 2) carry bounded garbage
    that is never read back by the math (zero weight rows / wrapper slice).
    """
    num_layers = wih_ref.shape[0]
    four_h = x_ref.shape[1]
    H = four_h // 4
    T = x_ref.shape[0] // batch
    unroll = True if T <= 16 else 8

    # Loop-invariant lane masks / scale vectors (hoisted once: JAX does not
    # CSE broadcast_in_dim, so never rebuild these inside the loops).
    lane = jax.lax.broadcasted_iota(jnp.int32, (batch, four_h), 1)
    is_g = jnp.logical_and(lane >= 2 * H, lane < 3 * H)     # candidate gate g
    is_home = jnp.logical_and(lane >= H, lane < 2 * H)      # block 1: home of h/c
    gate_scale = jnp.where(is_g, 1.0, 0.5)                  # tanh(g) vs sigmoid-via-tanh
    gate_shift = jnp.where(is_g, 0.0, 0.5)

    for layer in range(num_layers):
        wih = wih_ref[layer]          # (4H, 4H)
        whh = whh_ref[layer]          # (4H, 4H)
        b = b_ref[layer]              # (1, 4H)

        # Hoisted input projection for ALL timesteps: one MXU matmul.
        # Layer 0 reads the input slab; layer l>0 reads layer l-1's h sequence
        # (zero weight rows make the junk lane blocks of hseq irrelevant).
        src = x_ref[...] if layer == 0 else hseq_scr[...]
        gx_scr[...] = jnp.dot(src, wih, preferred_element_type=jnp.float32) + b

        def step(t, carry, whh=whh):
            h_prev, c_prev = carry
            row = pl.multiple_of(t * batch, batch)            # sublane-aligned
            gates = gx_scr[pl.ds(row, batch), :] + jnp.dot(
                h_prev, whh, preferred_element_type=jnp.float32)  # (Bp,4H) [i|f|g|o]
            # ONE EUP transcendental for all four gates:
            #   sigmoid(x) = 0.5*tanh(0.5x) + 0.5 on i/f/o lanes, tanh(x) on g.
            th = jnp.tanh(gates * gate_scale)
            act = th * gate_scale + gate_shift                # [si|sf|tg|so]
            # Lane alignment on the XLU only; correct under either roll
            # direction convention (2H is a half-rotation, and the i*g product
            # sits at BOTH even blocks before the H rotation).
            act_h = pltpu.roll(act, 2 * H, axis=1)            # [tg|so|si|sf]
            ig = pltpu.roll(act * act_h, H, axis=1)           # si*tg @ blocks 1,3
            f_b = jnp.where(is_home, act, act_h)              # sf    @ blocks 1,3
            o_b = jnp.where(is_home, act_h, act)              # so    @ blocks 1,3
            c_new = f_b * c_prev + ig                         # valid @ blocks 1,3
            h_new = o_b * jnp.tanh(c_new)                     # valid @ blocks 1,3
            hseq_scr[pl.ds(row, batch), :] = h_new            # lane-dense store
            return (h_new, c_new)

        zeros = jnp.zeros((batch, four_h), jnp.float32)       # h0 = c0 = 0 ('task')
        jax.lax.fori_loop(0, T, step, (zeros, zeros), unroll=unroll)

    if skip:
        y_ref[...] = hseq_scr[...] + x_ref[...]
    else:
        y_ref[...] = hseq_scr[...]


def pack_slstm_params(params):
    """Pack PyTorch-layout LSTM params into kernel-ready slabs.

    Call ONCE at init time -- NOT inside the per-call forward path (the dozen
    tiny repacking ops would otherwise dominate this microsecond-scale forward).

    params: list of per-layer dicts with 'w_ih' (4H, in), 'w_hh' (4H, H),
            'b_ih' (4H,), 'b_hh' (4H,) in PyTorch gate order (i, f, g, o).
    """
    H = params[0]["w_hh"].shape[1]
    four_h = 4 * H

    def embed(w):                                   # (4H, IN) -> (4H, 4H)
        w_t = jnp.transpose(w).astype(jnp.float32)  # (IN, 4H)
        assert w_t.shape[0] <= 3 * H
        big = jnp.zeros((four_h, four_h), jnp.float32)
        return big.at[H:H + w_t.shape[0], :].set(w_t)   # live rows start at H

    wih = jnp.stack([embed(p["w_ih"]) for p in params])            # (L,4H,4H)
    whh = jnp.stack([embed(p["w_hh"]) for p in params])            # (L,4H,4H)
    b = jnp.stack([(p["b_ih"] + p["b_hh"]).astype(jnp.float32)[None, :]
                   for p in params])                               # (L,1,4H)
    return {"wih": wih, "whh": whh, "b": b}


def slstm_forward(x_bct, packed, skip=True):
    """SLSTM.forward (stage='task' semantics: zero-initialized h0/c0).

    x_bct : (B, C, T) PyTorch conv layout.  packed: pack_slstm_params() output.
    returns (B, C, T)
    """
    B, C, T = x_bct.shape
    L, four_h, _ = packed["wih"].shape
    H = four_h // 4
    assert C == H, "SLSTM requires input channels == hidden size (skip add)"

    Bp = max(8, -(-B // 8) * 8)        # pad batch to a sublane multiple

    # (B,C,T) -> time-major (T*Bp, 4H) slab: channels parked at lane block 1
    # ([H, 2H)), matching the packed-weight row placement; padding lanes/rows 0.
    x_tbc = jnp.transpose(x_bct, (2, 0, 1)).astype(jnp.float32)
    x_pad = jnp.pad(x_tbc, ((0, 0), (0, Bp - B), (H, four_h - H - C)))
    x_flat = x_pad.reshape(T * Bp, four_h)

    # VMEM footprint guard for the fully-resident design.
    slab = T * Bp * four_h * 4
    est = 6 * slab + 4 * L * four_h * four_h * 4 + (1 << 20)
    if est > 48 * 2 ** 20:
        # TODO(synk): time-chunk the recurrence for long sequences.
        raise ValueError(f"T={T} too long for the fully VMEM-resident kernel")

    kernel = functools.partial(_slstm_fused_kernel, batch=Bp, skip=skip)

    y_flat = pl.pallas_call(
        kernel,
        out_shape=jax.ShapeDtypeStruct((T * Bp, four_h), jnp.float32),
        grid_spec=pltpu.PrefetchScalarGridSpec(
            num_scalar_prefetch=0,
            grid=(1,),                       # single step: everything VMEM-resident
            in_specs=[
                pl.BlockSpec((T * Bp, four_h), lambda i: (0, 0)),
                pl.BlockSpec((L, four_h, four_h), lambda i: (0, 0, 0)),
                pl.BlockSpec((L, four_h, four_h), lambda i: (0, 0, 0)),
                pl.BlockSpec((L, 1, four_h), lambda i: (0, 0, 0)),
            ],
            out_specs=pl.BlockSpec((T * Bp, four_h), lambda i: (0, 0)),
            scratch_shapes=[
                pltpu.VMEM((T * Bp, four_h), jnp.float32),   # gx
                pltpu.VMEM((T * Bp, four_h), jnp.float32),   # h sequence
            ],
        ),
        compiler_params=pltpu.CompilerParams(
            dimension_semantics=("arbitrary",),              # recurrence is serial
            vmem_limit_bytes=int(max(est, 16 * 2 ** 20)),
        ),
    )(x_flat, packed["wih"], packed["whh"], packed["b"])

    # Drop batch padding, pick the h lane block, back to (B, C, T).
    y = y_flat.reshape(T, Bp, four_h)[:, :B, H:2 * H]
    return jnp.transpose(y, (1, 2, 0))


def _reference_slstm(x_bct, params, skip=True):
    """Pure-JAX reference (lax.scan) matching PyTorch nn.LSTM gate order."""
    prec = jax.lax.Precision.HIGHEST
    x = jnp.transpose(x_bct, (2, 0, 1)).astype(jnp.float32)  # (T, B, C)
    h_seq = x
    for p in params:
        H = p["w_hh"].shape[1]
        w_ih_t = jnp.transpose(p["w_ih"])
        w_hh_t = jnp.transpose(p["w_hh"])
        b = p["b_ih"] + p["b_hh"]

        def step(carry, x_t, w_ih_t=w_ih_t, w_hh_t=w_hh_t, b=b, H=H):
            h, c = carry
            gates = (jnp.dot(x_t, w_ih_t, precision=prec)
                     + jnp.dot(h, w_hh_t, precision=prec) + b)
            i = jax.nn.sigmoid(gates[:, 0 * H:1 * H])
            f = jax.nn.sigmoid(gates[:, 1 * H:2 * H])
            g = jnp.tanh(gates[:, 2 * H:3 * H])
            o = jax.nn.sigmoid(gates[:, 3 * H:4 * H])
            c = f * c + i * g
            h = o * jnp.tanh(c)
            return (h, c), h

        Bsz = x.shape[1]
        h0 = jnp.zeros((Bsz, H), jnp.float32)
        c0 = jnp.zeros((Bsz, H), jnp.float32)
        _, h_seq = jax.lax.scan(step, (h0, c0), h_seq)
    y = h_seq + x if skip else h_seq
    return jnp.transpose(y, (1, 2, 0))


def init_slstm_params(key, dimension, num_layers=2):
    """Deterministic init matching nn.LSTM parameter shapes."""
    H = dimension
    k = 1.0 / jnp.sqrt(jnp.float32(H))
    params = []
    for _ in range(num_layers):
        in_dim = dimension  # hidden_size == input_size for SLSTM
        key, k1, k2, k3, k4 = jax.random.split(key, 5)
        params.append({
            "w_ih": jax.random.uniform(k1, (4 * H, in_dim), jnp.float32, -k, k),
            "w_hh": jax.random.uniform(k2, (4 * H, H), jnp.float32, -k, k),
            "b_ih": jax.random.uniform(k3, (4 * H,), jnp.float32, -k, k),
            "b_hh": jax.random.uniform(k4, (4 * H,), jnp.float32, -k, k),
        })
    return params


if __name__ == "__main__":
    key = jax.random.PRNGKey(0)
    B, C, T = 2, 32, 8          # dimension = 32, conv layout (B, C, T)
    num_layers = 2

    k_x, k_p = jax.random.split(key)
    x = jax.random.normal(k_x, (B, C, T), jnp.float32)
    params = init_slstm_params(k_p, dimension=C, num_layers=num_layers)

    # Weight packing hoisted out of the forward path: done once, reused.
    packed = pack_slstm_params(params)
    packed = jax.tree_util.tree_map(jax.block_until_ready, packed)

    fwd = jax.jit(functools.partial(slstm_forward, skip=True))
    y = fwd(x, packed)
    jax.block_until_ready(y)

    y_ref = _reference_slstm(x, params, skip=True)
    assert y.shape == (B, C, T)
    max_err = float(jnp.max(jnp.abs(y - y_ref)))
    assert max_err < 1e-3, f"mismatch vs reference: max abs err {max_err}"
    print("KERNEL_OK")
</pallas_src>

<mosaic_0001>
module attributes {stable_mosaic.version = 11 : i64} {
  func.func @_slstm_fused_kernel(%arg0: i32, %arg1: memref<64x128xf32, #tpu.memory_space<vmem>>, %arg2: memref<2x128x128xf32, #tpu.memory_space<vmem>>, %arg3: memref<2x128x128xf32, #tpu.memory_space<vmem>>, %arg4: memref<2x1x128xf32, #tpu.memory_space<vmem>>, %arg5: memref<64x128xf32, #tpu.memory_space<vmem>>, %arg6: memref<64x128xf32, #tpu.memory_space<vmem>>, %arg7: memref<64x128xf32, #tpu.memory_space<vmem>>) attributes {dimension_semantics = [#tpu.dimension_semantics<arbitrary>], iteration_bounds = array<i64: 1>, scalar_prefetch = 0 : i64, scratch_operands = 2 : i64, tpu.core_type = #tpu.core_type<tc>, window_params = [{pipeline_mode = #tpu.pipeline_mode<synchronous>, transform_indices = @transform_0, window_bounds = array<i64: 64, 128>}, {pipeline_mode = #tpu.pipeline_mode<synchronous>, transform_indices = @transform_1, window_bounds = array<i64: 2, 128, 128>}, {pipeline_mode = #tpu.pipeline_mode<synchronous>, transform_indices = @transform_2, window_bounds = array<i64: 2, 128, 128>}, {pipeline_mode = #tpu.pipeline_mode<synchronous>, transform_indices = @transform_3, window_bounds = array<i64: 2, 1, 128>}, {pipeline_mode = #tpu.pipeline_mode<synchronous>, transform_indices = @transform_4, window_bounds = array<i64: 64, 128>}]} {
    %0 = tpu.iota {dimensions = array<i32: 1>} : vector<8x128xi32>
    %c64_i32 = arith.constant 64 : i32
    %1 = vector.broadcast %c64_i32 : i32 to vector<8x128xi32>
    %2 = arith.cmpi sge, %0, %1 : vector<8x128xi32>
    %c96_i32 = arith.constant 96 : i32
    %3 = vector.broadcast %c96_i32 : i32 to vector<8x128xi32>
    %4 = arith.cmpi slt, %0, %3 : vector<8x128xi32>
    %5 = arith.andi %2, %4 : vector<8x128xi1>
    %c32_i32 = arith.constant 32 : i32
    %6 = vector.broadcast %c32_i32 : i32 to vector<8x128xi32>
    %7 = arith.cmpi sge, %0, %6 : vector<8x128xi32>
    %c64_i32_0 = arith.constant 64 : i32
    %8 = vector.broadcast %c64_i32_0 : i32 to vector<8x128xi32>
    %9 = arith.cmpi slt, %0, %8 : vector<8x128xi32>
    %10 = arith.andi %7, %9 : vector<8x128xi1>
    %cst = arith.constant 1.000000e+00 : f32
    %cst_1 = arith.constant 5.000000e-01 : f32
    %11 = vector.broadcast %cst : f32 to vector<8x128xf32>
    %12 = vector.broadcast %cst_1 : f32 to vector<8x128xf32>
    %13 = arith.select %5, %11, %12 : vector<8x128xi1>, vector<8x128xf32>
    %cst_2 = arith.constant 0.000000e+00 : f32
    %cst_3 = arith.constant 5.000000e-01 : f32
    %14 = vector.broadcast %cst_2 : f32 to vector<8x128xf32>
    %15 = vector.broadcast %cst_3 : f32 to vector<8x128xf32>
    %16 = arith.select %5, %14, %15 : vector<8x128xi1>, vector<8x128xf32>
    %c0 = arith.constant 0 : index
    %c0_4 = arith.constant 0 : index
    %c0_5 = arith.constant 0 : index
    %17 = vector.load %arg2[%c0, %c0_4, %c0_5] : memref<2x128x128xf32, #tpu.memory_space<vmem>>, vector<1x128x128xf32>
    %18 = vector.shape_cast %17 : vector<1x128x128xf32> to vector<128x128xf32>
    %c0_6 = arith.constant 0 : index
    %c0_7 = arith.constant 0 : index
    %c0_8 = arith.constant 0 : index
    %19 = vector.load %arg3[%c0_6, %c0_7, %c0_8] : memref<2x128x128xf32, #tpu.memory_space<vmem>>, vector<1x128x128xf32>
    %20 = vector.shape_cast %19 : vector<1x128x128xf32> to vector<128x128xf32>
    %c0_9 = arith.constant 0 : index
    %c0_10 = arith.constant 0 : index
    %c0_11 = arith.constant 0 : index
    %21 = vector.load %arg4[%c0_9, %c0_10, %c0_11] : memref<2x1x128xf32, #tpu.memory_space<vmem>>, vector<1x1x128xf32>
    %22 = vector.shape_cast %21 : vector<1x1x128xf32> to vector<1x128xf32>
    %c0_12 = arith.constant 0 : index
    %c0_13 = arith.constant 0 : index
    %23 = vector.load %arg1[%c0_12, %c0_13] : memref<64x128xf32, #tpu.memory_space<vmem>>, vector<64x128xf32>
    %cst_14 = arith.constant dense<0.000000e+00> : vector<64x128xf32>
    %24 = tpu.matmul %23, %18, %cst_14 {dimension_numbers = #tpu.dot_dimension_numbers<[1], [0], [0], [1], [0, 0, 1, 1], [], []>} : vector<64x128xf32>, vector<128x128xf32>, vector<64x128xf32> -> vector<64x128xf32>
    %25 = vector.broadcast %22 : vector<1x128xf32> to vector<64x128xf32>
    %26 = arith.addf %24, %25 : vector<64x128xf32>
    %c0_15 = arith.constant 0 : index
    %c0_16 = arith.constant 0 : index
    %27 = vector.load %arg6[%c0_15, %c0_16] : memref<64x128xf32, #tpu.memory_space<vmem>>, vector<64x128xf32>
    tpu.vector_store %arg6[%c0_15, %c0_16], %26 {strides = array<i32>} : memref<64x128xf32, #tpu.memory_space<vmem>>, vector<64x128xf32>,
    %cst_17 = arith.constant 0.000000e+00 : f32
    %28 = vector.broadcast %cst_17 : f32 to vector<8x128xf32>
    %c0_i32 = arith.constant 0 : i32
    %c8_i32 = arith.constant 8 : i32
    %29 = arith.muli %c0_i32, %c8_i32 : i32
    %30 = tpu.assume_multiple %29, 8 : i32
    %31 = arith.index_cast %30 : i32 to index
    %c0_18 = arith.constant 0 : index
    %32 = vector.load %arg6[%31, %c0_18] : memref<64x128xf32, #tpu.memory_space<vmem>>, vector<8x128xf32>
    %cst_19 = arith.constant dense<0.000000e+00> : vector<8x128xf32>
    %33 = tpu.matmul %28, %20, %cst_19 {dimension_numbers = #tpu.dot_dimension_numbers<[1], [0], [0], [1], [0, 0, 1, 1], [], []>} : vector<8x128xf32>, vector<128x128xf32>, vector<8x128xf32> -> vector<8x128xf32>
    %34 = arith.addf %32, %33 : vector<8x128xf32>
    %35 = arith.mulf %34, %13 : vector<8x128xf32>
    %36 = math.tanh %35 : vector<8x128xf32>
    %37 = arith.mulf %36, %13 : vector<8x128xf32>
    %38 = arith.addf %37, %16 : vector<8x128xf32>
    %c64_i32_20 = arith.constant 64 : i32
    %39 = tpu.dynamic_rotate %38 by %c64_i32_20 dim 1 : vector<8x128xf32>, i32 -> vector<8x128xf32>
    %40 = arith.mulf %38, %39 : vector<8x128xf32>
    %c32_i32_21 = arith.constant 32 : i32
    %41 = tpu.dynamic_rotate %40 by %c32_i32_21 dim 1 : vector<8x128xf32>, i32 -> vector<8x128xf32>
    %42 = arith.select %10, %38, %39 : vector<8x128xi1>, vector<8x128xf32>
    %43 = arith.select %10, %39, %38 : vector<8x128xi1>, vector<8x128xf32>
    %44 = arith.mulf %42, %28 : vector<8x128xf32>
    %45 = arith.addf %44, %41 : vector<8x128xf32>
    %46 = math.tanh %45 : vector<8x128xf32>
    %47 = arith.mulf %43, %46 : vector<8x128xf32>
    %48 = arith.index_cast %30 : i32 to index
    %c0_22 = arith.constant 0 : index
    %49 = vector.load %arg7[%48, %c0_22] : memref<64x128xf32, #tpu.memory_space<vmem>>, vector<8x128xf32>
    tpu.vector_store %arg7[%48, %c0_22], %47 {strides = array<i32>} : memref<64x128xf32, #tpu.memory_space<vmem>>, vector<8x128xf32>,
    %c1_i32 = arith.constant 1 : i32
    %c8_i32_23 = arith.constant 8 : i32
    %50 = arith.muli %c1_i32, %c8_i32_23 : i32
    %51 = tpu.assume_multiple %50, 8 : i32
    %52 = arith.index_cast %51 : i32 to index
    %c0_24 = arith.constant 0 : index
    %53 = vector.load %arg6[%52, %c0_24] : memref<64x128xf32, #tpu.memory_space<vmem>>, vector<8x128xf32>
    %cst_25 = arith.constant dense<0.000000e+00> : vector<8x128xf32>
    %54 = tpu.matmul %47, %20, %cst_25 {dimension_numbers = #tpu.dot_dimension_numbers<[1], [0], [0], [1], [0, 0, 1, 1], [], []>} : vector<8x128xf32>, vector<128x128xf32>, vector<8x128xf32> -> vector<8x128xf32>
    %55 = arith.addf %53, %54 : vector<8x128xf32>
    %56 = arith.mulf %55, %13 : vector<8x128xf32>
    %57 = math.tanh %56 : vector<8x128xf32>
    %58 = arith.mulf %57, %13 : vector<8x128xf32>
    %59 = arith.addf %58, %16 : vector<8x128xf32>
    %c64_i32_26 = arith.constant 64 : i32
    %60 = tpu.dynamic_rotate %59 by %c64_i32_26 dim 1 : vector<8x128xf32>, i32 -> vector<8x128xf32>
    %61 = arith.mulf %59, %60 : vector<8x128xf32>
    %c32_i32_27 = arith.constant 32 : i32
    %62 = tpu.dynamic_rotate %61 by %c32_i32_27 dim 1 : vector<8x128xf32>, i32 -> vector<8x128xf32>
    %63 = arith.select %10, %59, %60 : vector<8x128xi1>, vector<8x128xf32>
    %64 = arith.select %10, %60, %59 : vector<8x128xi1>, vector<8x128xf32>
    %65 = arith.mulf %63, %45 : vector<8x128xf32>
    %66 = arith.addf %65, %62 : vector<8x128xf32>
    %67 = math.tanh %66 : vector<8x128xf32>
    %68 = arith.mulf %64, %67 : vector<8x128xf32>
    %69 = arith.index_cast %51 : i32 to index
    %c0_28 = arith.constant 0 : index
    %70 = vector.load %arg7[%69, %c0_28] : memref<64x128xf32, #tpu.memory_space<vmem>>, vector<8x128xf32>
    tpu.vector_store %arg7[%69, %c0_28], %68 {strides = array<i32>} : memref<64x128xf32, #tpu.memory_space<vmem>>, vector<8x128xf32>,
    %c2_i32 = arith.constant 2 : i32
    %c8_i32_29 = arith.constant 8 : i32
    %71 = arith.muli %c2_i32, %c8_i32_29 : i32
    %72 = tpu.assume_multiple %71, 8 : i32
    %73 = arith.index_cast %72 : i32 to index
    %c0_30 = arith.constant 0 : index
    %74 = vector.load %arg6[%73, %c0_30] : memref<64x128xf32, #tpu.memory_space<vmem>>, vector<8x128xf32>
    %cst_31 = arith.constant dense<0.000000e+00> : vector<8x128xf32>
    %75 = tpu.matmul %68, %20, %cst_31 {dimension_numbers = #tpu.dot_dimension_numbers<[1], [0], [0], [1], [0, 0, 1, 1], [], []>} : vector<8x128xf32>, vector<128x128xf32>, vector<8x128xf32> -> vector<8x128xf32>
    %76 = arith.addf %74, %75 : vector<8x128xf32>
    %77 = arith.mulf %76, %13 : vector<8x128xf32>
    %78 = math.tanh %77 : vector<8x128xf32>
    %79 = arith.mulf %78, %13 : vector<8x128xf32>
    %80 = arith.addf %79, %16 : vector<8x128xf32>
    %c64_i32_32 = arith.constant 64 : i32
    %81 = tpu.dynamic_rotate %80 by %c64_i32_32 dim 1 : vector<8x128xf32>, i32 -> vector<8x128xf32>
    %82 = arith.mulf %80, %81 : vector<8x128xf32>
    %c32_i32_33 = arith.constant 32 : i32
    %83 = tpu.dynamic_rotate %82 by %c32_i32_33 dim 1 : vector<8x128xf32>, i32 -> vector<8x128xf32>
    %84 = arith.select %10, %80, %81 : vector<8x128xi1>, vector<8x128xf32>
    %85 = arith.select %10, %81, %80 : vector<8x128xi1>, vector<8x128xf32>
    %86 = arith.mulf %84, %66 : vector<8x128xf32>
    %87 = arith.addf %86, %83 : vector<8x128xf32>
    %88 = math.tanh %87 : vector<8x128xf32>
    %89 = arith.mulf %85, %88 : vector<8x128xf32>
    %90 = arith.index_cast %72 : i32 to index
    %c0_34 = arith.constant 0 : index
    %91 = vector.load %arg7[%90, %c0_34] : memref<64x128xf32, #tpu.memory_space<vmem>>, vector<8x128xf32>
    tpu.vector_store %arg7[%90, %c0_34], %89 {strides = array<i32>} : memref<64x128xf32, #tpu.memory_space<vmem>>, vector<8x128xf32>,
    %c3_i32 = arith.constant 3 : i32
    %c8_i32_35 = arith.constant 8 : i32
    %92 = arith.muli %c3_i32, %c8_i32_35 : i32
    %93 = tpu.assume_multiple %92, 8 : i32
    %94 = arith.index_cast %93 : i32 to index
    %c0_36 = arith.constant 0 : index
    %95 = vector.load %arg6[%94, %c0_36] : memref<64x128xf32, #tpu.memory_space<vmem>>, vector<8x128xf32>
    %cst_37 = arith.constant dense<0.000000e+00> : vector<8x128xf32>
    %96 = tpu.matmul %89, %20, %cst_37 {dimension_numbers = #tpu.dot_dimension_numbers<[1], [0], [0], [1], [0, 0, 1, 1], [], []>} : vector<8x128xf32>, vector<128x128xf32>, vector<8x128xf32> -> vector<8x128xf32>
    %97 = arith.addf %95, %96 : vector<8x128xf32>
    %98 = arith.mulf %97, %13 : vector<8x128xf32>
    %99 = math.tanh %98 : vector<8x128xf32>
    %100 = arith.mulf %99, %13 : vector<8x128xf32>
    %101 = arith.addf %100, %16 : vector<8x128xf32>
    %c64_i32_38 = arith.constant 64 : i32
    %102 = tpu.dynamic_rotate %101 by %c64_i32_38 dim 1 : vector<8x128xf32>, i32 -> vector<8x128xf32>
    %103 = arith.mulf %101, %102 : vector<8x128xf32>
    %c32_i32_39 = arith.constant 32 : i32
    %104 = tpu.dynamic_rotate %103 by %c32_i32_39 dim 1 : vector<8x128xf32>, i32 -> vector<8x128xf32>
    %105 = arith.select %10, %101, %102 : vector<8x128xi1>, vector<8x128xf32>
    %106 = arith.select %10, %102, %101 : vector<8x128xi1>, vector<8x128xf32>
    %107 = arith.mulf %105, %87 : vector<8x128xf32>
    %108 = arith.addf %107, %104 : vector<8x128xf32>
    %109 = math.tanh %108 : vector<8x128xf32>
    %110 = arith.mulf %106, %109 : vector<8x128xf32>
    %111 = arith.index_cast %93 : i32 to index
    %c0_40 = arith.constant 0 : index
    %112 = vector.load %arg7[%111, %c0_40] : memref<64x128xf32, #tpu.memory_space<vmem>>, vector<8x128xf32>
    tpu.vector_store %arg7[%111, %c0_40], %110 {strides = array<i32>} : memref<64x128xf32, #tpu.memory_space<vmem>>, vector<8x128xf32>,
    %c4_i32 = arith.constant 4 : i32
    %c8_i32_41 = arith.constant 8 : i32
    %113 = arith.muli %c4_i32, %c8_i32_41 : i32
    %114 = tpu.assume_multiple %113, 8 : i32
    %115 = arith.index_cast %114 : i32 to index
    %c0_42 = arith.constant 0 : index
    %116 = vector.load %arg6[%115, %c0_42] : memref<64x128xf32, #tpu.memory_space<vmem>>, vector<8x128xf32>
    %cst_43 = arith.constant dense<0.000000e+00> : vector<8x128xf32>
    %117 = tpu.matmul %110, %20, %cst_43 {dimension_numbers = #tpu.dot_dimension_numbers<[1], [0], [0], [1], [0, 0, 1, 1], [], []>} : vector<8x128xf32>, vector<128x128xf32>, vector<8x128xf32> -> vector<8x128xf32>
    %118 = arith.addf %116, %117 : vector<8x128xf32>
    %119 = arith.mulf %118, %13 : vector<8x128xf32>
    %120 = math.tanh %119 : vector<8x128xf32>
    %121 = arith.mulf %120, %13 : vector<8x128xf32>
    %122 = arith.addf %121, %16 : vector<8x128xf32>
    %c64_i32_44 = arith.constant 64 : i32
    %123 = tpu.dynamic_rotate %122 by %c64_i32_44 dim 1 : vector<8x128xf32>, i32 -> vector<8x128xf32>
    %124 = arith.mulf %122, %123 : vector<8x128xf32>
    %c32_i32_45 = arith.constant 32 : i32
    %125 = tpu.dynamic_rotate %124 by %c32_i32_45 dim 1 : vector<8x128xf32>, i32 -> vector<8x128xf32>
    %126 = arith.select %10, %122, %123 : vector<8x128xi1>, vector<8x128xf32>
    %127 = arith.select %10, %123, %122 : vector<8x128xi1>, vector<8x128xf32>
    %128 = arith.mulf %126, %108 : vector<8x128xf32>
    %129 = arith.addf %128, %125 : vector<8x128xf32>
    %130 = math.tanh %129 : vector<8x128xf32>
    %131 = arith.mulf %127, %130 : vector<8x128xf32>
    %132 = arith.index_cast %114 : i32 to index
    %c0_46 = arith.constant 0 : index
    %133 = vector.load %arg7[%132, %c0_46] : memref<64x128xf32, #tpu.memory_space<vmem>>, vector<8x128xf32>
    tpu.vector_store %arg7[%132, %c0_46], %131 {strides = array<i32>} : memref<64x128xf32, #tpu.memory_space<vmem>>, vector<8x128xf32>,
    %c5_i32 = arith.constant 5 : i32
    %c8_i32_47 = arith.constant 8 : i32
    %134 = arith.muli %c5_i32, %c8_i32_47 : i32
    %135 = tpu.assume_multiple %134, 8 : i32
    %136 = arith.index_cast %135 : i32 to index
    %c0_48 = arith.constant 0 : index
    %137 = vector.load %arg6[%136, %c0_48] : memref<64x128xf32, #tpu.memory_space<vmem>>, vector<8x128xf32>
    %cst_49 = arith.constant dense<0.000000e+00> : vector<8x128xf32>
    %138 = tpu.matmul %131, %20, %cst_49 {dimension_numbers = #tpu.dot_dimension_numbers<[1], [0], [0], [1], [0, 0, 1, 1], [], []>} : vector<8x128xf32>, vector<128x128xf32>, vector<8x128xf32> -> vector<8x128xf32>
    %139 = arith.addf %137, %138 : vector<8x128xf32>
    %140 = arith.mulf %139, %13 : vector<8x128xf32>
    %141 = math.tanh %140 : vector<8x128xf32>
    %142 = arith.mulf %141, %13 : vector<8x128xf32>
    %143 = arith.addf %142, %16 : vector<8x128xf32>
    %c64_i32_50 = arith.constant 64 : i32
    %144 = tpu.dynamic_rotate %143 by %c64_i32_50 dim 1 : vector<8x128xf32>, i32 -> vector<8x128xf32>
    %145 = arith.mulf %143, %144 : vector<8x128xf32>
    %c32_i32_51 = arith.constant 32 : i32
    %146 = tpu.dynamic_rotate %145 by %c32_i32_51 dim 1 : vector<8x128xf32>, i32 -> vector<8x128xf32>
    %147 = arith.select %10, %143, %144 : vector<8x128xi1>, vector<8x128xf32>
    %148 = arith.select %10, %144, %143 : vector<8x128xi1>, vector<8x128xf32>
    %149 = arith.mulf %147, %129 : vector<8x128xf32>
    %150 = arith.addf %149, %146 : vector<8x128xf32>
    %151 = math.tanh %150 : vector<8x128xf32>
    %152 = arith.mulf %148, %151 : vector<8x128xf32>
    %153 = arith.index_cast %135 : i32 to index
    %c0_52 = arith.constant 0 : index
    %154 = vector.load %arg7[%153, %c0_52] : memref<64x128xf32, #tpu.memory_space<vmem>>, vector<8x128xf32>
    tpu.vector_store %arg7[%153, %c0_52], %152 {strides = array<i32>} : memref<64x128xf32, #tpu.memory_space<vmem>>, vector<8x128xf32>,
    %c6_i32 = arith.constant 6 : i32
    %c8_i32_53 = arith.constant 8 : i32
    %155 = arith.muli %c6_i32, %c8_i32_53 : i32
    %156 = tpu.assume_multiple %155, 8 : i32
    %157 = arith.index_cast %156 : i32 to index
    %c0_54 = arith.constant 0 : index
    %158 = vector.load %arg6[%157, %c0_54] : memref<64x128xf32, #tpu.memory_space<vmem>>, vector<8x128xf32>
    %cst_55 = arith.constant dense<0.000000e+00> : vector<8x128xf32>
    %159 = tpu.matmul %152, %20, %cst_55 {dimension_numbers = #tpu.dot_dimension_numbers<[1], [0], [0], [1], [0, 0, 1, 1], [], []>} : vector<8x128xf32>, vector<128x128xf32>, vector<8x128xf32> -> vector<8x128xf32>
    %160 = arith.addf %158, %159 : vector<8x128xf32>
    %161 = arith.mulf %160, %13 : vector<8x128xf32>
    %162 = math.tanh %161 : vector<8x128xf32>
    %163 = arith.mulf %162, %13 : vector<8x128xf32>
    %164 = arith.addf %163, %16 : vector<8x128xf32>
    %c64_i32_56 = arith.constant 64 : i32
    %165 = tpu.dynamic_rotate %164 by %c64_i32_56 dim 1 : vector<8x128xf32>, i32 -> vector<8x128xf32>
    %166 = arith.mulf %164, %165 : vector<8x128xf32>
    %c32_i32_57 = arith.constant 32 : i32
    %167 = tpu.dynamic_rotate %166 by %c32_i32_57 dim 1 : vector<8x128xf32>, i32 -> vector<8x128xf32>
    %168 = arith.select %10, %164, %165 : vector<8x128xi1>, vector<8x128xf32>
    %169 = arith.select %10, %165, %164 : vector<8x128xi1>, vector<8x128xf32>
    %170 = arith.mulf %168, %150 : vector<8x128xf32>
    %171 = arith.addf %170, %167 : vector<8x128xf32>
    %172 = math.tanh %171 : vector<8x128xf32>
    %173 = arith.mulf %169, %172 : vector<8x128xf32>
    %174 = arith.index_cast %156 : i32 to index
    %c0_58 = arith.constant 0 : index
    %175 = vector.load %arg7[%174, %c0_58] : memref<64x128xf32, #tpu.memory_space<vmem>>, vector<8x128xf32>
    tpu.vector_store %arg7[%174, %c0_58], %173 {strides = array<i32>} : memref<64x128xf32, #tpu.memory_space<vmem>>, vector<8x128xf32>,
    %c7_i32 = arith.constant 7 : i32
    %c8_i32_59 = arith.constant 8 : i32
    %176 = arith.muli %c7_i32, %c8_i32_59 : i32
    %177 = tpu.assume_multiple %176, 8 : i32
    %178 = arith.index_cast %177 : i32 to index
    %c0_60 = arith.constant 0 : index
    %179 = vector.load %arg6[%178, %c0_60] : memref<64x128xf32, #tpu.memory_space<vmem>>, vector<8x128xf32>
    %cst_61 = arith.constant dense<0.000000e+00> : vector<8x128xf32>
    %180 = tpu.matmul %173, %20, %cst_61 {dimension_numbers = #tpu.dot_dimension_numbers<[1], [0], [0], [1], [0, 0, 1, 1], [], []>} : vector<8x128xf32>, vector<128x128xf32>, vector<8x128xf32> -> vector<8x128xf32>
    %181 = arith.addf %179, %180 : vector<8x128xf32>
    %182 = arith.mulf %181, %13 : vector<8x128xf32>
    %183 = math.tanh %182 : vector<8x128xf32>
    %184 = arith.mulf %183, %13 : vector<8x128xf32>
    %185 = arith.addf %184, %16 : vector<8x128xf32>
    %c64_i32_62 = arith.constant 64 : i32
    %186 = tpu.dynamic_rotate %185 by %c64_i32_62 dim 1 : vector<8x128xf32>, i32 -> vector<8x128xf32>
    %187 = arith.mulf %185, %186 : vector<8x128xf32>
    %c32_i32_63 = arith.constant 32 : i32
    %188 = tpu.dynamic_rotate %187 by %c32_i32_63 dim 1 : vector<8x128xf32>, i32 -> vector<8x128xf32>
    %189 = arith.select %10, %185, %186 : vector<8x128xi1>, vector<8x128xf32>
    %190 = arith.select %10, %186, %185 : vector<8x128xi1>, vector<8x128xf32>
    %191 = arith.mulf %189, %171 : vector<8x128xf32>
    %192 = arith.addf %191, %188 : vector<8x128xf32>
    %193 = math.tanh %192 : vector<8x128xf32>
    %194 = arith.mulf %190, %193 : vector<8x128xf32>
    %195 = arith.index_cast %177 : i32 to index
    %c0_64 = arith.constant 0 : index
    %196 = vector.load %arg7[%195, %c0_64] : memref<64x128xf32, #tpu.memory_space<vmem>>, vector<8x128xf32>
    tpu.vector_store %arg7[%195, %c0_64], %194 {strides = array<i32>} : memref<64x128xf32, #tpu.memory_space<vmem>>, vector<8x128xf32>,
    %c8_i32_65 = arith.constant 8 : i32
    %c1 = arith.constant 1 : index
    %c0_66 = arith.constant 0 : index
    %c0_67 = arith.constant 0 : index
    %197 = vector.load %arg2[%c1, %c0_66, %c0_67] : memref<2x128x128xf32, #tpu.memory_space<vmem>>, vector<1x128x128xf32>
    %198 = vector.shape_cast %197 : vector<1x128x128xf32> to vector<128x128xf32>
    %c1_68 = arith.constant 1 : index
    %c0_69 = arith.constant 0 : index
    %c0_70 = arith.constant 0 : index
    %199 = vector.load %arg3[%c1_68, %c0_69, %c0_70] : memref<2x128x128xf32, #tpu.memory_space<vmem>>, vector<1x128x128xf32>
    %200 = vector.shape_cast %199 : vector<1x128x128xf32> to vector<128x128xf32>
    %c1_71 = arith.constant 1 : index
    %c0_72 = arith.constant 0 : index
    %c0_73 = arith.constant 0 : index
    %201 = vector.load %arg4[%c1_71, %c0_72, %c0_73] : memref<2x1x128xf32, #tpu.memory_space<vmem>>, vector<1x1x128xf32>
    %202 = vector.shape_cast %201 : vector<1x1x128xf32> to vector<1x128xf32>
    %c0_74 = arith.constant 0 : index
    %c0_75 = arith.constant 0 : index
    %203 = vector.load %arg7[%c0_74, %c0_75] : memref<64x128xf32, #tpu.memory_space<vmem>>, vector<64x128xf32>
    %cst_76 = arith.constant dense<0.000000e+00> : vector<64x128xf32>
    %204 = tpu.matmul %203, %198, %cst_76 {dimension_numbers = #tpu.dot_dimension_numbers<[1], [0], [0], [1], [0, 0, 1, 1], [], []>} : vector<64x128xf32>, vector<128x128xf32>, vector<64x128xf32> -> vector<64x128xf32>
    %205 = vector.broadcast %202 : vector<1x128xf32> to vector<64x128xf32>
    %206 = arith.addf %204, %205 : vector<64x128xf32>
    %c0_77 = arith.constant 0 : index
    %c0_78 = arith.constant 0 : index
    %207 = vector.load %arg6[%c0_77, %c0_78] : memref<64x128xf32, #tpu.memory_space<vmem>>, vector<64x128xf32>
    tpu.vector_store %arg6[%c0_77, %c0_78], %206 {strides = array<i32>} : memref<64x128xf32, #tpu.memory_space<vmem>>, vector<64x128xf32>,
    %cst_79 = arith.constant 0.000000e+00 : f32
    %208 = vector.broadcast %cst_79 : f32 to vector<8x128xf32>
    %c0_i32_80 = arith.constant 0 : i32
    %c8_i32_81 = arith.constant 8 : i32
    %209 = arith.muli %c0_i32_80, %c8_i32_81 : i32
    %210 = tpu.assume_multiple %209, 8 : i32
    %211 = arith.index_cast %210 : i32 to index
    %c0_82 = arith.constant 0 : index
    %212 = vector.load %arg6[%211, %c0_82] : memref<64x128xf32, #tpu.memory_space<vmem>>, vector<8x128xf32>
    %cst_83 = arith.constant dense<0.000000e+00> : vector<8x128xf32>
    %213 = tpu.matmul %208, %200, %cst_83 {dimension_numbers = #tpu.dot_dimension_numbers<[1], [0], [0], [1], [0, 0, 1, 1], [], []>} : vector<8x128xf32>, vector<128x128xf32>, vector<8x128xf32> -> vector<8x128xf32>
    %214 = arith.addf %212, %213 : vector<8x128xf32>
    %215 = arith.mulf %214, %13 : vector<8x128xf32>
    %216 = math.tanh %215 : vector<8x128xf32>
    %217 = arith.mulf %216, %13 : vector<8x128xf32>
    %218 = arith.addf %217, %16 : vector<8x128xf32>
    %c64_i32_84 = arith.constant 64 : i32
    %219 = tpu.dynamic_rotate %218 by %c64_i32_84 dim 1 : vector<8x128xf32>, i32 -> vector<8x128xf32>
    %220 = arith.mulf %218, %219 : vector<8x128xf32>
    %c32_i32_85 = arith.constant 32 : i32
    %221 = tpu.dynamic_rotate %220 by %c32_i32_85 dim 1 : vector<8x128xf32>, i32 -> vector<8x128xf32>
    %222 = arith.select %10, %218, %219 : vector<8x128xi1>, vector<8x128xf32>
    %223 = arith.select %10, %219, %218 : vector<8x128xi1>, vector<8x128xf32>
    %224 = arith.mulf %222, %208 : vector<8x128xf32>
    %225 = arith.addf %224, %221 : vector<8x128xf32>
    %226 = math.tanh %225 : vector<8x128xf32>
    %227 = arith.mulf %223, %226 : vector<8x128xf32>
    %228 = arith.index_cast %210 : i32 to index
    %c0_86 = arith.constant 0 : index
    %229 = vector.load %arg7[%228, %c0_86] : memref<64x128xf32, #tpu.memory_space<vmem>>, vector<8x128xf32>
    tpu.vector_store %arg7[%228, %c0_86], %227 {strides = array<i32>} : memref<64x128xf32, #tpu.memory_space<vmem>>, vector<8x128xf32>,
    %c1_i32_87 = arith.constant 1 : i32
    %c8_i32_88 = arith.constant 8 : i32
    %230 = arith.muli %c1_i32_87, %c8_i32_88 : i32
    %231 = tpu.assume_multiple %230, 8 : i32
    %232 = arith.index_cast %231 : i32 to index
    %c0_89 = arith.constant 0 : index
    %233 = vector.load %arg6[%232, %c0_89] : memref<64x128xf32, #tpu.memory_space<vmem>>, vector<8x128xf32>
    %cst_90 = arith.constant dense<0.000000e+00> : vector<8x128xf32>
    %234 = tpu.matmul %227, %200, %cst_90 {dimension_numbers = #tpu.dot_dimension_numbers<[1], [0], [0], [1], [0, 0, 1, 1], [], []>} : vector<8x128xf32>, vector<128x128xf32>, vector<8x128xf32> -> vector<8x128xf32>
    %235 = arith.addf %233, %234 : vector<8x128xf32>
    %236 = arith.mulf %235, %13 : vector<8x128xf32>
    %237 = math.tanh %236 : vector<8x128xf32>
    %238 = arith.mulf %237, %13 : vector<8x128xf32>
    %239 = arith.addf %238, %16 : vector<8x128xf32>
    %c64_i32_91 = arith.constant 64 : i32
    %240 = tpu.dynamic_rotate %239 by %c64_i32_91 dim 1 : vector<8x128xf32>, i32 -> vector<8x128xf32>
    %241 = arith.mulf %239, %240 : vector<8x128xf32>
    %c32_i32_92 = arith.constant 32 : i32
    %242 = tpu.dynamic_rotate %241 by %c32_i32_92 dim 1 : vector<8x128xf32>, i32 -> vector<8x128xf32>
    %243 = arith.select %10, %239, %240 : vector<8x128xi1>, vector<8x128xf32>
    %244 = arith.select %10, %240, %239 : vector<8x128xi1>, vector<8x128xf32>
    %245 = arith.mulf %243, %225 : vector<8x128xf32>
    %246 = arith.addf %245, %242 : vector<8x128xf32>
    %247 = math.tanh %246 : vector<8x128xf32>
    %248 = arith.mulf %244, %247 : vector<8x128xf32>
    %249 = arith.index_cast %231 : i32 to index
    %c0_93 = arith.constant 0 : index
    %250 = vector.load %arg7[%249, %c0_93] : memref<64x128xf32, #tpu.memory_space<vmem>>, vector<8x128xf32>
    tpu.vector_store %arg7[%249, %c0_93], %248 {strides = array<i32>} : memref<64x128xf32, #tpu.memory_space<vmem>>, vector<8x128xf32>,
    %c2_i32_94 = arith.constant 2 : i32
    %c8_i32_95 = arith.constant 8 : i32
    %251 = arith.muli %c2_i32_94, %c8_i32_95 : i32
    %252 = tpu.assume_multiple %251, 8 : i32
    %253 = arith.index_cast %252 : i32 to index
    %c0_96 = arith.constant 0 : index
    %254 = vector.load %arg6[%253, %c0_96] : memref<64x128xf32, #tpu.memory_space<vmem>>, vector<8x128xf32>
    %cst_97 = arith.constant dense<0.000000e+00> : vector<8x128xf32>
    %255 = tpu.matmul %248, %200, %cst_97 {dimension_numbers = #tpu.dot_dimension_numbers<[1], [0], [0], [1], [0, 0, 1, 1], [], []>} : vector<8x128xf32>, vector<128x128xf32>, vector<8x128xf32> -> vector<8x128xf32>
    %256 = arith.addf %254, %255 : vector<8x128xf32>
    %257 = arith.mulf %256, %13 : vector<8x128xf32>
    %258 = math.tanh %257 : vector<8x128xf32>
    %259 = arith.mulf %258, %13 : vector<8x128xf32>
    %260 = arith.addf %259, %16 : vector<8x128xf32>
    %c64_i32_98 = arith.constant 64 : i32
    %261 = tpu.dynamic_rotate %260 by %c64_i32_98 dim 1 : vector<8x128xf32>, i32 -> vector<8x128xf32>
    %262 = arith.mulf %260, %261 : vector<8x128xf32>
    %c32_i32_99 = arith.constant 32 : i32
    %263 = tpu.dynamic_rotate %262 by %c32_i32_99 dim 1 : vector<8x128xf32>, i32 -> vector<8x128xf32>
    %264 = arith.select %10, %260, %261 : vector<8x128xi1>, vector<8x128xf32>
    %265 = arith.select %10, %261, %260 : vector<8x128xi1>, vector<8x128xf32>
    %266 = arith.mulf %264, %246 : vector<8x128xf32>
    %267 = arith.addf %266, %263 : vector<8x128xf32>
    %268 = math.tanh %267 : vector<8x128xf32>
    %269 = arith.mulf %265, %268 : vector<8x128xf32>
    %270 = arith.index_cast %252 : i32 to index
    %c0_100 = arith.constant 0 : index
    %271 = vector.load %arg7[%270, %c0_100] : memref<64x128xf32, #tpu.memory_space<vmem>>, vector<8x128xf32>
    tpu.vector_store %arg7[%270, %c0_100], %269 {strides = array<i32>} : memref<64x128xf32, #tpu.memory_space<vmem>>, vector<8x128xf32>,
    %c3_i32_101 = arith.constant 3 : i32
    %c8_i32_102 = arith.constant 8 : i32
    %272 = arith.muli %c3_i32_101, %c8_i32_102 : i32
    %273 = tpu.assume_multiple %272, 8 : i32
    %274 = arith.index_cast %273 : i32 to index
    %c0_103 = arith.constant 0 : index
    %275 = vector.load %arg6[%274, %c0_103] : memref<64x128xf32, #tpu.memory_space<vmem>>, vector<8x128xf32>
    %cst_104 = arith.constant dense<0.000000e+00> : vector<8x128xf32>
    %276 = tpu.matmul %269, %200, %cst_104 {dimension_numbers = #tpu.dot_dimension_numbers<[1], [0], [0], [1], [0, 0, 1, 1], [], []>} : vector<8x128xf32>, vector<128x128xf32>, vector<8x128xf32> -> vector<8x128xf32>
    %277 = arith.addf %275, %276 : vector<8x128xf32>
    %278 = arith.mulf %277, %13 : vector<8x128xf32>
    %279 = math.tanh %278 : vector<8x128xf32>
    %280 = arith.mulf %279, %13 : vector<8x128xf32>
    %281 = arith.addf %280, %16 : vector<8x128xf32>
    %c64_i32_105 = arith.constant 64 : i32
    %282 = tpu.dynamic_rotate %281 by %c64_i32_105 dim 1 : vector<8x128xf32>, i32 -> vector<8x128xf32>
    %283 = arith.mulf %281, %282 : vector<8x128xf32>
    %c32_i32_106 = arith.constant 32 : i32
    %284 = tpu.dynamic_rotate %283 by %c32_i32_106 dim 1 : vector<8x128xf32>, i32 -> vector<8x128xf32>
    %285 = arith.select %10, %281, %282 : vector<8x128xi1>, vector<8x128xf32>
    %286 = arith.select %10, %282, %281 : vector<8x128xi1>, vector<8x128xf32>
    %287 = arith.mulf %285, %267 : vector<8x128xf32>
    %288 = arith.addf %287, %284 : vector<8x128xf32>
    %289 = math.tanh %288 : vector<8x128xf32>
    %290 = arith.mulf %286, %289 : vector<8x128xf32>
    %291 = arith.index_cast %273 : i32 to index
    %c0_107 = arith.constant 0 : index
    %292 = vector.load %arg7[%291, %c0_107] : memref<64x128xf32, #tpu.memory_space<vmem>>, vector<8x128xf32>
    tpu.vector_store %arg7[%291, %c0_107], %290 {strides = array<i32>} : memref<64x128xf32, #tpu.memory_space<vmem>>, vector<8x128xf32>,
    %c4_i32_108 = arith.constant 4 : i32
    %c8_i32_109 = arith.constant 8 : i32
    %293 = arith.muli %c4_i32_108, %c8_i32_109 : i32
    %294 = tpu.assume_multiple %293, 8 : i32
    %295 = arith.index_cast %294 : i32 to index
    %c0_110 = arith.constant 0 : index
    %296 = vector.load %arg6[%295, %c0_110] : memref<64x128xf32, #tpu.memory_space<vmem>>, vector<8x128xf32>
    %cst_111 = arith.constant dense<0.000000e+00> : vector<8x128xf32>
    %297 = tpu.matmul %290, %200, %cst_111 {dimension_numbers = #tpu.dot_dimension_numbers<[1], [0], [0], [1], [0, 0, 1, 1], [], []>} : vector<8x128xf32>, vector<128x128xf32>, vector<8x128xf32> -> vector<8x128xf32>
    %298 = arith.addf %296, %297 : vector<8x128xf32>
    %299 = arith.mulf %298, %13 : vector<8x128xf32>
    %300 = math.tanh %299 : vector<8x128xf32>
    %301 = arith.mulf %300, %13 : vector<8x128xf32>
    %302 = arith.addf %301, %16 : vector<8x128xf32>
    %c64_i32_112 = arith.constant 64 : i32
    %303 = tpu.dynamic_rotate %302 by %c64_i32_112 dim 1 : vector<8x128xf32>, i32 -> vector<8x128xf32>
    %304 = arith.mulf %302, %303 : vector<8x128xf32>
    %c32_i32_113 = arith.constant 32 : i32
    %305 = tpu.dynamic_rotate %304 by %c32_i32_113 dim 1 : vector<8x128xf32>, i32 -> vector<8x128xf32>
    %306 = arith.select %10, %302, %303 : vector<8x128xi1>, vector<8x128xf32>
    %307 = arith.select %10, %303, %302 : vector<8x128xi1>, vector<8x128xf32>
    %308 = arith.mulf %306, %288 : vector<8x128xf32>
    %309 = arith.addf %308, %305 : vector<8x128xf32>
    %310 = math.tanh %309 : vector<8x128xf32>
    %311 = arith.mulf %307, %310 : vector<8x128xf32>
    %312 = arith.index_cast %294 : i32 to index
    %c0_114 = arith.constant 0 : index
    %313 = vector.load %arg7[%312, %c0_114] : memref<64x128xf32, #tpu.memory_space<vmem>>, vector<8x128xf32>
    tpu.vector_store %arg7[%312, %c0_114], %311 {strides = array<i32>} : memref<64x128xf32, #tpu.memory_space<vmem>>, vector<8x128xf32>,
    %c5_i32_115 = arith.constant 5 : i32
    %c8_i32_116 = arith.constant 8 : i32
    %314 = arith.muli %c5_i32_115, %c8_i32_116 : i32
    %315 = tpu.assume_multiple %314, 8 : i32
    %316 = arith.index_cast %315 : i32 to index
    %c0_117 = arith.constant 0 : index
    %317 = vector.load %arg6[%316, %c0_117] : memref<64x128xf32, #tpu.memory_space<vmem>>, vector<8x128xf32>
    %cst_118 = arith.constant dense<0.000000e+00> : vector<8x128xf32>
    %318 = tpu.matmul %311, %200, %cst_118 {dimension_numbers = #tpu.dot_dimension_numbers<[1], [0], [0], [1], [0, 0, 1, 1], [], []>} : vector<8x128xf32>, vector<128x128xf32>, vector<8x128xf32> -> vector<8x128xf32>
    %319 = arith.addf %317, %318 : vector<8x128xf32>
    %320 = arith.mulf %319, %13 : vector<8x128xf32>
    %321 = math.tanh %320 : vector<8x128xf32>
    %322 = arith.mulf %321, %13 : vector<8x128xf32>
    %323 = arith.addf %322, %16 : vector<8x128xf32>
    %c64_i32_119 = arith.constant 64 : i32
    %324 = tpu.dynamic_rotate %323 by %c64_i32_119 dim 1 : vector<8x128xf32>, i32 -> vector<8x128xf32>
    %325 = arith.mulf %323, %324 : vector<8x128xf32>
    %c32_i32_120 = arith.constant 32 : i32
    %326 = tpu.dynamic_rotate %325 by %c32_i32_120 dim 1 : vector<8x128xf32>, i32 -> vector<8x128xf32>
    %327 = arith.select %10, %323, %324 : vector<8x128xi1>, vector<8x128xf32>
    %328 = arith.select %10, %324, %323 : vector<8x128xi1>, vector<8x128xf32>
    %329 = arith.mulf %327, %309 : vector<8x128xf32>
    %330 = arith.addf %329, %326 : vector<8x128xf32>
    %331 = math.tanh %330 : vector<8x128xf32>
    %332 = arith.mulf %328, %331 : vector<8x128xf32>
    %333 = arith.index_cast %315 : i32 to index
    %c0_121 = arith.constant 0 : index
    %334 = vector.load %arg7[%333, %c0_121] : memref<64x128xf32, #tpu.memory_space<vmem>>, vector<8x128xf32>
    tpu.vector_store %arg7[%333, %c0_121], %332 {strides = array<i32>} : memref<64x128xf32, #tpu.memory_space<vmem>>, vector<8x128xf32>,
    %c6_i32_122 = arith.constant 6 : i32
    %c8_i32_123 = arith.constant 8 : i32
    %335 = arith.muli %c6_i32_122, %c8_i32_123 : i32
    %336 = tpu.assume_multiple %335, 8 : i32
    %337 = arith.index_cast %336 : i32 to index
    %c0_124 = arith.constant 0 : index
    %338 = vector.load %arg6[%337, %c0_124] : memref<64x128xf32, #tpu.memory_space<vmem>>, vector<8x128xf32>
    %cst_125 = arith.constant dense<0.000000e+00> : vector<8x128xf32>
    %339 = tpu.matmul %332, %200, %cst_125 {dimension_numbers = #tpu.dot_dimension_numbers<[1], [0], [0], [1], [0, 0, 1, 1], [], []>} : vector<8x128xf32>, vector<128x128xf32>, vector<8x128xf32> -> vector<8x128xf32>
    %340 = arith.addf %338, %339 : vector<8x128xf32>
    %341 = arith.mulf %340, %13 : vector<8x128xf32>
    %342 = math.tanh %341 : vector<8x128xf32>
    %343 = arith.mulf %342, %13 : vector<8x128xf32>
    %344 = arith.addf %343, %16 : vector<8x128xf32>
    %c64_i32_126 = arith.constant 64 : i32
    %345 = tpu.dynamic_rotate %344 by %c64_i32_126 dim 1 : vector<8x128xf32>, i32 -> vector<8x128xf32>
    %346 = arith.mulf %344, %345 : vector<8x128xf32>
    %c32_i32_127 = arith.constant 32 : i32
    %347 = tpu.dynamic_rotate %346 by %c32_i32_127 dim 1 : vector<8x128xf32>, i32 -> vector<8x128xf32>
    %348 = arith.select %10, %344, %345 : vector<8x128xi1>, vector<8x128xf32>
    %349 = arith.select %10, %345, %344 : vector<8x128xi1>, vector<8x128xf32>
    %350 = arith.mulf %348, %330 : vector<8x128xf32>
    %351 = arith.addf %350, %347 : vector<8x128xf32>
    %352 = math.tanh %351 : vector<8x128xf32>
    %353 = arith.mulf %349, %352 : vector<8x128xf32>
    %354 = arith.index_cast %336 : i32 to index
    %c0_128 = arith.constant 0 : index
    %355 = vector.load %arg7[%354, %c0_128] : memref<64x128xf32, #tpu.memory_space<vmem>>, vector<8x128xf32>
    tpu.vector_store %arg7[%354, %c0_128], %353 {strides = array<i32>} : memref<64x128xf32, #tpu.memory_space<vmem>>, vector<8x128xf32>,
    %c7_i32_129 = arith.constant 7 : i32
    %c8_i32_130 = arith.constant 8 : i32
    %356 = arith.muli %c7_i32_129, %c8_i32_130 : i32
    %357 = tpu.assume_multiple %356, 8 : i32
    %358 = arith.index_cast %357 : i32 to index
    %c0_131 = arith.constant 0 : index
    %359 = vector.load %arg6[%358, %c0_131] : memref<64x128xf32, #tpu.memory_space<vmem>>, vector<8x128xf32>
    %cst_132 = arith.constant dense<0.000000e+00> : vector<8x128xf32>
    %360 = tpu.matmul %353, %200, %cst_132 {dimension_numbers = #tpu.dot_dimension_numbers<[1], [0], [0], [1], [0, 0, 1, 1], [], []>} : vector<8x128xf32>, vector<128x128xf32>, vector<8x128xf32> -> vector<8x128xf32>
    %361 = arith.addf %359, %360 : vector<8x128xf32>
    %362 = arith.mulf %361, %13 : vector<8x128xf32>
    %363 = math.tanh %362 : vector<8x128xf32>
    %364 = arith.mulf %363, %13 : vector<8x128xf32>
    %365 = arith.addf %364, %16 : vector<8x128xf32>
    %c64_i32_133 = arith.constant 64 : i32
    %366 = tpu.dynamic_rotate %365 by %c64_i32_133 dim 1 : vector<8x128xf32>, i32 -> vector<8x128xf32>
    %367 = arith.mulf %365, %366 : vector<8x128xf32>
    %c32_i32_134 = arith.constant 32 : i32
    %368 = tpu.dynamic_rotate %367 by %c32_i32_134 dim 1 : vector<8x128xf32>, i32 -> vector<8x128xf32>
    %369 = arith.select %10, %365, %366 : vector<8x128xi1>, vector<8x128xf32>
    %370 = arith.select %10, %366, %365 : vector<8x128xi1>, vector<8x128xf32>
    %371 = arith.mulf %369, %351 : vector<8x128xf32>
    %372 = arith.addf %371, %368 : vector<8x128xf32>
    %373 = math.tanh %372 : vector<8x128xf32>
    %374 = arith.mulf %370, %373 : vector<8x128xf32>
    %375 = arith.index_cast %357 : i32 to index
    %c0_135 = arith.constant 0 : index
    %376 = vector.load %arg7[%375, %c0_135] : memref<64x128xf32, #tpu.memory_space<vmem>>, vector<8x128xf32>
    tpu.vector_store %arg7[%375, %c0_135], %374 {strides = array<i32>} : memref<64x128xf32, #tpu.memory_space<vmem>>, vector<8x128xf32>,
    %c8_i32_136 = arith.constant 8 : i32
    %c0_137 = arith.constant 0 : index
    %c0_138 = arith.constant 0 : index
    %377 = vector.load %arg7[%c0_137, %c0_138] : memref<64x128xf32, #tpu.memory_space<vmem>>, vector<64x128xf32>
    %c0_139 = arith.constant 0 : index
    %c0_140 = arith.constant 0 : index
    %378 = vector.load %arg1[%c0_139, %c0_140] : memref<64x128xf32, #tpu.memory_space<vmem>>, vector<64x128xf32>
    %379 = arith.addf %377, %378 : vector<64x128xf32>
    %c0_141 = arith.constant 0 : index
    %c0_142 = arith.constant 0 : index
    %380 = vector.load %arg5[%c0_141, %c0_142] : memref<64x128xf32, #tpu.memory_space<vmem>>, vector<64x128xf32>
    tpu.vector_store %arg5[%c0_141, %c0_142], %379 {strides = array<i32>} : memref<64x128xf32, #tpu.memory_space<vmem>>, vector<64x128xf32>,
    return
  }
  func.func @transform_0(%arg0: i32) -> (i32, i32) {
    %c0_i32 = arith.constant 0 : i32
    %c0_i32_0 = arith.constant 0 : i32
    %c0_i32_1 = arith.constant 0 : i32
    return %c0_i32, %c0_i32_0 : i32, i32
  }
  func.func @transform_1(%arg0: i32) -> (i32, i32, i32) {
    %c0_i32 = arith.constant 0 : i32
    %c0_i32_0 = arith.constant 0 : i32
    %c0_i32_1 = arith.constant 0 : i32
    %c0_i32_2 = arith.constant 0 : i32
    return %c0_i32, %c0_i32_0, %c0_i32_1 : i32, i32, i32
  }
  func.func @transform_2(%arg0: i32) -> (i32, i32, i32) {
    %c0_i32 = arith.constant 0 : i32
    %c0_i32_0 = arith.constant 0 : i32
    %c0_i32_1 = arith.constant 0 : i32
    %c0_i32_2 = arith.constant 0 : i32
    return %c0_i32, %c0_i32_0, %c0_i32_1 : i32, i32, i32
  }
  func.func @transform_3(%arg0: i32) -> (i32, i32, i32) {
    %c0_i32 = arith.constant 0 : i32
    %c0_i32_0 = arith.constant 0 : i32
    %c0_i32_1 = arith.constant 0 : i32
    %c0_i32_2 = arith.constant 0 : i32
    return %c0_i32, %c0_i32_0, %c0_i32_1 : i32, i32, i32
  }
  func.func @transform_4(%arg0: i32) -> (i32, i32) {
    %c0_i32 = arith.constant 0 : i32
    %c0_i32_0 = arith.constant 0 : i32
    %c0_i32_1 = arith.constant 0 : i32
    return %c0_i32, %c0_i32_0 : i32, i32
  }
}

</mosaic_0001>

<llo_original>
// kernel: slstm_forward.1
$region0: #{slstm_forward.1}
  #allocation0 [shape = 'u32[]', space=smem, size = 0x4, offset = 0x4, fixed_abs, tag = 'smem constant byte address 0x4 - core index']
  #allocation1 [shape = 'u32[144,128]{1,0:T(1,128)}', space=vmem, size = 0x12000, scoped, tag = 'internal scratch']
  #allocation2 [shape = 'f32[64,128]{1,0:T(8,128)}', space=vmem, size = 0x8000, scoped, tag = 'scratch operand']
  #allocation3 [shape = 'f32[64,128]{1,0:T(8,128)}', space=vmem, size = 0x8000, scoped, tag = 'scratch operand']
  %s0 = inlined_call_operand.vmem [shape: f32[64,128], index: 0, kind: input, shape index: {}]
  %s1 = inlined_call_operand.hbm [shape: f32[2,128,128], index: 1, kind: input, shape index: {}]
  %s2 = inlined_call_operand.hbm [shape: f32[2,128,128], index: 2, kind: input, shape index: {}]
  %s3 = inlined_call_operand.vmem [shape: f32[2,1,128], index: 3, kind: input, shape index: {}]
  %s4 = inlined_call_operand.vmem [shape: f32[64,128], index: 4, kind: output, shape index: {}]
  %s5 = sld [smem:[#allocation0]]
  $region34: #{slstm_forward.1} parent=0
    _
  %s7 = ssub.s32 1, %s5
  %s8 = scalar_select 0, %s7, %s5
  $region1: #{slstm_forward.1} parent=0
    #allocation4 [shape = 'u8[131072]{0}', space=vmem, size = 0x20000, scoped, tag = 'input window, operand 1, single buffered']
    #allocation5 [shape = 's32[1]{0}', space=sflag, size = 0x4, scoped, tag = 'scoped memory for slstm_forward.1']
    #allocation6 [shape = 'u8[131072]{0}', space=vmem, size = 0x20000, scoped, tag = 'input window, operand 2, single buffered']
    #allocation7 [shape = 's32[1]{0}', space=sflag, size = 0x4, scoped, tag = 'scoped memory for slstm_forward.1']
    %9 = vsyncpa [#allocation5], 0
    %10 = vsyncpa [#allocation7], 0
    // Predicated region
    $region2: #{slstm_forward.1} parent=1 // pred_check
      _
    $region3: #{slstm_forward.1} parent=1 // pred_check_branch
      %12 = sbr.rel (0) target = $region5
    $region4: #{slstm_forward.1} parent=1 // pred_region
      _
    $region5: #{slstm_forward.1} parent=1 // pred_fallthru
      _
    // Predicated region
    $region6: #{slstm_forward.1} parent=1 // pred_check
      _
    $region7: #{slstm_forward.1} parent=1 // pred_check_branch
      %14 = sbr.rel (0) target = $region9
    $region8: #{slstm_forward.1} parent=1 // pred_region
      %s16 = ssub.s32 4096, 4096
      %17 = vsyncadd [#allocation5], %s16
      %s18 = sshll.u32 [#allocation4], 4
      %s19 = int_to_ptr.vmem [resolvable:$true] %s18
      %24 = dma.hbm_to_vmem [thread:$0]  %s1, 4096, %s19, [#allocation5], 128, 128, 8
    $region9: #{slstm_forward.1} parent=1 // pred_fallthru
      _
    // Predicated region
    $region10: #{slstm_forward.1} parent=1 // pred_check
      _
    $region11: #{slstm_forward.1} parent=1 // pred_check_branch
      %26 = sbr.rel (0) target = $region13
    $region12: #{slstm_forward.1} parent=1 // pred_region
      %s28 = ssub.s32 4096, 4096
      %29 = vsyncadd [#allocation7], %s28
      %s30 = sshll.u32 [#allocation6], 4
      %s31 = int_to_ptr.vmem [resolvable:$true] %s30
      %36 = dma.hbm_to_vmem [thread:$0]  %s2, 4096, %s31, [#allocation7], 128, 128, 8
    $region13: #{slstm_forward.1} parent=1 // pred_fallthru
      _
    // Predicated region
    $region14: #{slstm_forward.1} parent=1 // pred_check
      _
    $region15: #{slstm_forward.1} parent=1 // pred_check_branch
      %38 = sbr.rel (0) target = $region17
    $region16: #{slstm_forward.1} parent=1 // pred_region
      _
    $region17: #{slstm_forward.1} parent=1 // pred_fallthru
      _
    // Predicated region
    $region18: #{slstm_forward.1} parent=1 // pred_check
      _
    $region19: #{slstm_forward.1} parent=1 // pred_check_branch
      %40 = sbr.rel (0) target = $region21
    $region20: #{slstm_forward.1} parent=1 // pred_region
      %41 = dma.done [#allocation5], 4096
    $region21: #{slstm_forward.1} parent=1 // pred_fallthru
      _
    // Predicated region
    $region22: #{slstm_forward.1} parent=1 // pred_check
      _
    $region23: #{slstm_forward.1} parent=1 // pred_check_branch
      %43 = sbr.rel (0) target = $region25
    $region24: #{slstm_forward.1} parent=1 // pred_region
      %44 = dma.done [#allocation7], 4096
    $region25: #{slstm_forward.1} parent=1 // pred_fallthru
      _
    %v45 = vlaneseq
    %v46 = vand.u32 %v45, 127
    %vm47 = vcmp.ge.s32.totalorder %v46, 64
    %vm48 = vcmp.lt.s32.totalorder %v46, 96
    %vm49 = vmand %vm47, %vm48
    %vm50 = vcmp.ge.s32.totalorder %v46, 32
    %vm51 = vcmp.lt.s32.totalorder %v46, 64
    %vm52 = vmand %vm50, %vm51
    %v53 = vsel %vm49, 1.0, 0.5
    %v54 = vsel %vm49, 0.0, 0.5
    %v55 = vld [vmem:[#allocation4] sm:$0xff]
    %v56 = vld [vmem:[#allocation4 + $0x8] sm:$0xff]
    %v57 = vld [vmem:[#allocation4 + $0x10] sm:$0xff]
    %v58 = vld [vmem:[#allocation4 + $0x18] sm:$0xff]
    %v59 = vld [vmem:[#allocation4 + $0x20] sm:$0xff]
    %v60 = vld [vmem:[#allocation4 + $0x28] sm:$0xff]
    %v61 = vld [vmem:[#allocation4 + $0x30] sm:$0xff]
    %v62 = vld [vmem:[#allocation4 + $0x38] sm:$0xff]
    %v63 = vld [vmem:[#allocation4 + $0x40] sm:$0xff]
    %v64 = vld [vmem:[#allocation4 + $0x48] sm:$0xff]
    %v65 = vld [vmem:[#allocation4 + $0x50] sm:$0xff]
    %v66 = vld [vmem:[#allocation4 + $0x58] sm:$0xff]
    %v67 = vld [vmem:[#allocation4 + $0x60] sm:$0xff]
    %v68 = vld [vmem:[#allocation4 + $0x68] sm:$0xff]
    %v69 = vld [vmem:[#allocation4 + $0x70] sm:$0xff]
    %v70 = vld [vmem:[#allocation4 + $0x78] sm:$0xff]
    %v71 = vld [vmem:[#allocation6] sm:$0xff]
    %v72 = vld [vmem:[#allocation6 + $0x8] sm:$0xff]
    %v73 = vld [vmem:[#allocation6 + $0x10] sm:$0xff]
    %v74 = vld [vmem:[#allocation6 + $0x18] sm:$0xff]
    %v75 = vld [vmem:[#allocation6 + $0x20] sm:$0xff]
    %v76 = vld [vmem:[#allocation6 + $0x28] sm:$0xff]
    %v77 = vld [vmem:[#allocation6 + $0x30] sm:$0xff]
    %v78 = vld [vmem:[#allocation6 + $0x38] sm:$0xff]
    %v79 = vld [vmem:[#allocation6 + $0x40] sm:$0xff]
    %v80 = vld [vmem:[#allocation6 + $0x48] sm:$0xff]
    %v81 = vld [vmem:[#allocation6 + $0x50] sm:$0xff]
    %v82 = vld [vmem:[#allocation6 + $0x58] sm:$0xff]
    %v83 = vld [vmem:[#allocation6 + $0x60] sm:$0xff]
    %v84 = vld [vmem:[#allocation6 + $0x68] sm:$0xff]
    %v85 = vld [vmem:[#allocation6 + $0x70] sm:$0xff]
    %v86 = vld [vmem:[#allocation6 + $0x78] sm:$0xff]
    %v87 = vld [vmem:[%s3] sm:$0x1]
    %v88 = vld [vmem:[%s0] sm:$0xff]
    %v89 = vld [vmem:[%s0 + $0x8] sm:$0xff]
    %v90 = vld [vmem:[%s0 + $0x10] sm:$0xff]
    %v91 = vld [vmem:[%s0 + $0x18] sm:$0xff]
    %v92 = vld [vmem:[%s0 + $0x20] sm:$0xff]
    %v93 = vld [vmem:[%s0 + $0x28] sm:$0xff]
    %v94 = vld [vmem:[%s0 + $0x30] sm:$0xff]
    %v95 = vld [vmem:[%s0 + $0x38] sm:$0xff]
    %v97 = vlaneseq
    %v98 = vshrl.u32 %v97, 7
    %v99 = vsub.s32 0, %v98
    %v100 = vrot.slane %v87, %v99
    %102 = vmatprep.subr.mxu0 0.0
    %103 = vmatpush1.msra.mxu0 %v70
    %104 = vmatprep.subr.mxu0 0.0
    %105 = vmatpush1.msra.mxu0 %v69
    %106 = vmatprep.subr.mxu0 0.0
    %107 = vmatpush1.msra.mxu0 %v68
    %108 = vmatprep.subr.mxu0 0.0
    %109 = vmatpush1.msra.mxu0 %v67
    %110 = vmatprep.subr.mxu0 0.0
    %111 = vmatpush1.msra.mxu0 %v66
    %112 = vmatprep.subr.mxu0 0.0
    %113 = vmatpush1.msra.mxu0 %v65
    %114 = vmatprep.subr.mxu0 0.0
    %115 = vmatpush1.msra.mxu0 %v64
    %116 = vmatprep.subr.mxu0 0.0
    %117 = vmatpush1.msra.mxu0 %v63
    %118 = vmatprep.subr.mxu0 0.0
    %119 = vmatpush1.msra.mxu0 %v62
    %120 = vmatprep.subr.mxu0 0.0
    %121 = vmatpush1.msra.mxu0 %v61
    %122 = vmatprep.subr.mxu0 0.0
    %123 = vmatpush1.msra.mxu0 %v60
    %124 = vmatprep.subr.mxu0 0.0
    %125 = vmatpush1.msra.mxu0 %v59
    %126 = vmatprep.subr.mxu0 0.0
    %127 = vmatpush1.msra.mxu0 %v58
    %128 = vmatprep.subr.mxu0 0.0
    %129 = vmatpush1.msra.mxu0 %v57
    %130 = vmatprep.subr.mxu0 0.0
    %131 = vmatpush1.msra.mxu0 %v56
    %132 = vmatprep.subr.mxu0 0.0
    %133 = vmatpush1.msra.mxu0 %v55
    %134 = vmatprep.subr.mxu0 0.0
    %135 = vmatpush2.msra.mxu0 0.0
    %136 = vmatprep.subr.mxu0 0.0
    %137 = vmatpush2.msra.mxu0 0.0
    %138 = vmatprep.subr.mxu0 0.0
    %139 = vmatpush2.msra.mxu0 0.0
    %140 = vmatprep.subr.mxu0 0.0
    %141 = vmatpush2.msra.mxu0 0.0
    %142 = vmatprep.subr.mxu0 0.0
    %143 = vmatpush2.msra.mxu0 0.0
    %144 = vmatprep.subr.mxu0 0.0
    %145 = vmatpush2.msra.mxu0 0.0
    %146 = vmatprep.subr.mxu0 0.0
    %147 = vmatpush2.msra.mxu0 0.0
    %148 = vmatprep.subr.mxu0 0.0
    %149 = vmatpush2.msra.mxu0 0.0
    %150 = vmatprep.subr.mxu0 0.0
    %151 = vmatpush2.msra.mxu0 0.0
    %152 = vmatprep.subr.mxu0 0.0
    %153 = vmatpush2.msra.mxu0 0.0
    %154 = vmatprep.subr.mxu0 0.0
    %155 = vmatpush2.msra.mxu0 0.0
    %156 = vmatprep.subr.mxu0 0.0
    %157 = vmatpush2.msra.mxu0 0.0
    %158 = vmatprep.subr.mxu0 0.0
    %159 = vmatpush2.msra.mxu0 0.0
    %160 = vmatprep.subr.mxu0 0.0
    %161 = vmatpush2.msra.mxu0 0.0
    %162 = vmatprep.subr.mxu0 0.0
    %163 = vmatpush2.msra.mxu0 0.0
    %164 = vmatprep.subr.mxu0 0.0
    %165 = vmatpush2.msra.mxu0 0.0
    %166 = vmatprep.mubr.f32.mxu0 0.0
    %167 = vmatmul.mubr.f32.gmra.mxu0 %v88
    %v168 = vpop.f32.mrf.mxu0
    %v169 = vadd.f32 %v100, %v168
    %v170 = vpop.f32.mrf.mxu0
    %171 = vmatprep.mubr.f32.mxu0 0.0
    %172 = vmatmul.mubr.f32.gmra.mxu0 %v89
    %v173 = vpop.f32.mrf.mxu0
    %v174 = vadd.f32 %v100, %v173
    %v175 = vpop.f32.mrf.mxu0
    %176 = vmatprep.mubr.f32.mxu0 0.0
    %177 = vmatmul.mubr.f32.gmra.mxu0 %v90
    %v178 = vpop.f32.mrf.mxu0
    %v179 = vadd.f32 %v100, %v178
    %v180 = vpop.f32.mrf.mxu0
    %181 = vmatprep.mubr.f32.mxu0 0.0
    %182 = vmatmul.mubr.f32.gmra.mxu0 %v91
    %v183 = vpop.f32.mrf.mxu0
    %v184 = vadd.f32 %v100, %v183
    %v185 = vpop.f32.mrf.mxu0
    %186 = vmatprep.mubr.f32.mxu0 0.0
    %187 = vmatmul.mubr.f32.gmra.mxu0 %v92
    %v188 = vpop.f32.mrf.mxu0
    %v189 = vadd.f32 %v100, %v188
    %v190 = vpop.f32.mrf.mxu0
    %191 = vmatprep.mubr.f32.mxu0 0.0
    %192 = vmatmul.mubr.f32.gmra.mxu0 %v93
    %v193 = vpop.f32.mrf.mxu0
    %v194 = vadd.f32 %v100, %v193
    %v195 = vpop.f32.mrf.mxu0
    %196 = vmatprep.mubr.f32.mxu0 0.0
    %197 = vmatmul.mubr.f32.gmra.mxu0 %v94
    %v198 = vpop.f32.mrf.mxu0
    %v199 = vadd.f32 %v100, %v198
    %v200 = vpop.f32.mrf.mxu0
    %201 = vmatprep.mubr.f32.mxu0 0.0
    %202 = vmatmul.mubr.f32.gmra.mxu0 %v95
    %v203 = vpop.f32.mrf.mxu0
    %v204 = vadd.f32 %v100, %v203
    %v205 = vpop.f32.mrf.mxu0
    %206 = vdwg.mxu0
    %207 = vst [vmem:[#allocation2] sm:$0xff] %v169
    %208 = vst [vmem:[#allocation2 + $0x8] sm:$0xff] %v174
    %209 = vst [vmem:[#allocation2 + $0x10] sm:$0xff] %v179
    %210 = vst [vmem:[#allocation2 + $0x18] sm:$0xff] %v184
    %211 = vst [vmem:[#allocation2 + $0x20] sm:$0xff] %v189
    %212 = vst [vmem:[#allocation2 + $0x28] sm:$0xff] %v194
    %213 = vst [vmem:[#allocation2 + $0x30] sm:$0xff] %v199
    %214 = vst [vmem:[#allocation2 + $0x38] sm:$0xff] %v204
    %v215 = vld [vmem:[#allocation2] sm:$0xff]
    %216 = vmatprep.subr.mxu0 0.0
    %217 = vmatpush1.msra.mxu0 %v86
    %218 = vmatprep.subr.mxu0 0.0
    %219 = vmatpush1.msra.mxu0 %v85
    %220 = vmatprep.subr.mxu0 0.0
    %221 = vmatpush1.msra.mxu0 %v84
    %222 = vmatprep.subr.mxu0 0.0
    %223 = vmatpush1.msra.mxu0 %v83
    %224 = vmatprep.subr.mxu0 0.0
    %225 = vmatpush1.msra.mxu0 %v82
    %226 = vmatprep.subr.mxu0 0.0
    %227 = vmatpush1.msra.mxu0 %v81
    %228 = vmatprep.subr.mxu0 0.0
    %229 = vmatpush1.msra.mxu0 %v80
    %230 = vmatprep.subr.mxu0 0.0
    %231 = vmatpush1.msra.mxu0 %v79
    %232 = vmatprep.subr.mxu0 0.0
    %233 = vmatpush1.msra.mxu0 %v78
    %234 = vmatprep.subr.mxu0 0.0
    %235 = vmatpush1.msra.mxu0 %v77
    %236 = vmatprep.subr.mxu0 0.0
    %237 = vmatpush1.msra.mxu0 %v76
    %238 = vmatprep.subr.mxu0 0.0
    %239 = vmatpush1.msra.mxu0 %v75
    %240 = vmatprep.subr.mxu0 0.0
    %241 = vmatpush1.msra.mxu0 %v74
    %242 = vmatprep.subr.mxu0 0.0
    %243 = vmatpush1.msra.mxu0 %v73
    %244 = vmatprep.subr.mxu0 0.0
    %245 = vmatpush1.msra.mxu0 %v72
    %246 = vmatprep.subr.mxu0 0.0
    %247 = vmatpush1.msra.mxu0 %v71
    %248 = vmatprep.subr.mxu0 0.0
    %249 = vmatpush2.msra.mxu0 0.0
    %250 = vmatprep.subr.mxu0 0.0
    %251 = vmatpush2.msra.mxu0 0.0
    %252 = vmatprep.subr.mxu0 0.0
    %253 = vmatpush2.msra.mxu0 0.0
    %254 = vmatprep.subr.mxu0 0.0
    %255 = vmatpush2.msra.mxu0 0.0
    %256 = vmatprep.subr.mxu0 0.0
    %257 = vmatpush2.msra.mxu0 0.0
    %258 = vmatprep.subr.mxu0 0.0
    %259 = vmatpush2.msra.mxu0 0.0
    %260 = vmatprep.subr.mxu0 0.0
    %261 = vmatpush2.msra.mxu0 0.0
    %262 = vmatprep.subr.mxu0 0.0
    %263 = vmatpush2.msra.mxu0 0.0
    %264 = vmatprep.subr.mxu0 0.0
    %265 = vmatpush2.msra.mxu0 0.0
    %266 = vmatprep.subr.mxu0 0.0
    %267 = vmatpush2.msra.mxu0 0.0
    %268 = vmatprep.subr.mxu0 0.0
    %269 = vmatpush2.msra.mxu0 0.0
    %270 = vmatprep.subr.mxu0 0.0
    %271 = vmatpush2.msra.mxu0 0.0
    %272 = vmatprep.subr.mxu0 0.0
    %273 = vmatpush2.msra.mxu0 0.0
    %274 = vmatprep.subr.mxu0 0.0
    %275 = vmatpush2.msra.mxu0 0.0
    %276 = vmatprep.subr.mxu0 0.0
    %277 = vmatpush2.msra.mxu0 0.0
    %278 = vmatprep.subr.mxu0 0.0
    %279 = vmatpush2.msra.mxu0 0.0
    %280 = vmatprep.mubr.f32.mxu0 0.0
    %281 = vmatmul.mubr.f32.gmra.mxu0 0.0
    %v282 = vpop.f32.mrf.mxu0
    %v283 = vadd.f32 0.0, %v282
    %v284 = vpop.f32.mrf.mxu0
    %285 = vdwg.mxu0
    %v286 = vadd.f32 %v215, %v283
    %v287 = vmul.f32 %v286, %v53
    %v288 = vtanh.pop %v287
    %v289 = vmul.f32 %v288, %v53
    %v290 = vadd.f32 %v289, %v54
    %291 = vrot.lane.b32.xlu0 %v290, 64
    %v292 = vpop.permute.xlu0 %291
    %v293 = vmul.f32 %v290, %v292
    %294 = vrot.lane.b32.xlu0 %v293, 32
    %v295 = vpop.permute.xlu0 %294
    %v296 = vsel %vm52, %v290, %v292
    %v297 = vsel %vm52, %v292, %v290
    %v298 = vmul.f32 %v296, 0.0
    %v299 = vadd.f32 %v298, %v295
    %v300 = vtanh.pop %v299
    %v301 = vmul.f32 %v297, %v300
    %302 = vst [vmem:[#allocation3] sm:$0xff] %v301
    %s303 = scalar_lea.vmem [#allocation2], 8
    %v304 = vld [vmem:[%s303] sm:$0xff]
    %305 = vmatprep.subr.mxu0 0.0
    %306 = vmatpush1.msra.mxu0 %v86
    %307 = vmatprep.subr.mxu0 0.0
    %308 = vmatpush1.msra.mxu0 %v85
    %309 = vmatprep.subr.mxu0 0.0
    %310 = vmatpush1.msra.mxu0 %v84
    %311 = vmatprep.subr.mxu0 0.0
    %312 = vmatpush1.msra.mxu0 %v83
    %313 = vmatprep.subr.mxu0 0.0
    %314 = vmatpush1.msra.mxu0 %v82
    %315 = vmatprep.subr.mxu0 0.0
    %316 = vmatpush1.msra.mxu0 %v81
    %317 = vmatprep.subr.mxu0 0.0
    %318 = vmatpush1.msra.mxu0 %v80
    %319 = vmatprep.subr.mxu0 0.0
    %320 = vmatpush1.msra.mxu0 %v79
    %321 = vmatprep.subr.mxu0 0.0
    %322 = vmatpush1.msra.mxu0 %v78
    %323 = vmatprep.subr.mxu0 0.0
    %324 = vmatpush1.msra.mxu0 %v77
    %325 = vmatprep.subr.mxu0 0.0
    %326 = vmatpush1.msra.mxu0 %v76
    %327 = vmatprep.subr.mxu0 0.0
    %328 = vmatpush1.msra.mxu0 %v75
    %329 = vmatprep.subr.mxu0 0.0
    %330 = vmatpush1.msra.mxu0 %v74
    %331 = vmatprep.subr.mxu0 0.0
    %332 = vmatpush1.msra.mxu0 %v73
    %333 = vmatprep.subr.mxu0 0.0
    %334 = vmatpush1.msra.mxu0 %v72
    %335 = vmatprep.subr.mxu0 0.0
    %336 = vmatpush1.msra.mxu0 %v71
    %337 = vmatprep.subr.mxu0 0.0
    %338 = vmatpush2.msra.mxu0 0.0
    %339 = vmatprep.subr.mxu0 0.0
    %340 = vmatpush2.msra.mxu0 0.0
    %341 = vmatprep.subr.mxu0 0.0
    %342 = vmatpush2.msra.mxu0 0.0
    %343 = vmatprep.subr.mxu0 0.0
    %344 = vmatpush2.msra.mxu0 0.0
    %345 = vmatprep.subr.mxu0 0.0
    %346 = vmatpush2.msra.mxu0 0.0
    %347 = vmatprep.subr.mxu0 0.0
    %348 = vmatpush2.msra.mxu0 0.0
    %349 = vmatprep.subr.mxu0 0.0
    %350 = vmatpush2.msra.mxu0 0.0
    %351 = vmatprep.subr.mxu0 0.0
    %352 = vmatpush2.msra.mxu0 0.0
    %353 = vmatprep.subr.mxu0 0.0
    %354 = vmatpush2.msra.mxu0 0.0
    %355 = vmatprep.subr.mxu0 0.0
    %356 = vmatpush2.msra.mxu0 0.0
    %357 = vmatprep.subr.mxu0 0.0
    %358 = vmatpush2.msra.mxu0 0.0
    %359 = vmatprep.subr.mxu0 0.0
    %360 = vmatpush2.msra.mxu0 0.0
    %361 = vmatprep.subr.mxu0 0.0
    %362 = vmatpush2.msra.mxu0 0.0
    %363 = vmatprep.subr.mxu0 0.0
    %364 = vmatpush2.msra.mxu0 0.0
    %365 = vmatprep.subr.mxu0 0.0
    %366 = vmatpush2.msra.mxu0 0.0
    %367 = vmatprep.subr.mxu0 0.0
    %368 = vmatpush2.msra.mxu0 0.0
    %369 = vmatprep.mubr.f32.mxu0 0.0
    %370 = vmatmul.mubr.f32.gmra.mxu0 %v301
    %v371 = vpop.f32.mrf.mxu0
    %v372 = vadd.f32 0.0, %v371
    %v373 = vpop.f32.mrf.mxu0
    %374 = vdwg.mxu0
    %v375 = vadd.f32 %v304, %v372
    %v376 = vmul.f32 %v375, %v53
    %v377 = vtanh.pop %v376
    %v378 = vmul.f32 %v377, %v53
    %v379 = vadd.f32 %v378, %v54
    %380 = vrot.lane.b32.xlu0 %v379, 64
    %v381 = vpop.permute.xlu0 %380
    %v382 = vmul.f32 %v379, %v381
    %383 = vrot.lane.b32.xlu0 %v382, 32
    %v384 = vpop.permute.xlu0 %383
    %v385 = vsel %vm52, %v379, %v381
    %v386 = vsel %vm52, %v381, %v379
    %v387 = vmul.f32 %v385, %v299
    %v388 = vadd.f32 %v387, %v384
    %v389 = vtanh.pop %v388
    %v390 = vmul.f32 %v386, %v389
    %s391 = scalar_lea.vmem [#allocation3], 8
    %392 = vst [vmem:[%s391] sm:$0xff] %v390
    %s393 = scalar_lea.vmem [#allocation2], 16
    %v394 = vld [vmem:[%s393] sm:$0xff]
    %395 = vmatprep.subr.mxu0 0.0
    %396 = vmatpush1.msra.mxu0 %v86
    %397 = vmatprep.subr.mxu0 0.0
    %398 = vmatpush1.msra.mxu0 %v85
    %399 = vmatprep.subr.mxu0 0.0
    %400 = vmatpush1.msra.mxu0 %v84
    %401 = vmatprep.subr.mxu0 0.0
    %402 = vmatpush1.msra.mxu0 %v83
    %403 = vmatprep.subr.mxu0 0.0
    %404 = vmatpush1.msra.mxu0 %v82
    %405 = vmatprep.subr.mxu0 0.0
    %406 = vmatpush1.msra.mxu0 %v81
    %407 = vmatprep.subr.mxu0 0.0
    %408 = vmatpush1.msra.mxu0 %v80
    %409 = vmatprep.subr.mxu0 0.0
    %410 = vmatpush1.msra.mxu0 %v79
    %411 = vmatprep.subr.mxu0 0.0
    %412 = vmatpush1.msra.mxu0 %v78
    %413 = vmatprep.subr.mxu0 0.0
    %414 = vmatpush1.msra.mxu0 %v77
    %415 = vmatprep.subr.mxu0 0.0
    %416 = vmatpush1.msra.mxu0 %v76
    %417 = vmatprep.subr.mxu0 0.0
    %418 = vmatpush1.msra.mxu0 %v75
    %419 = vmatprep.subr.mxu0 0.0
    %420 = vmatpush1.msra.mxu0 %v74
    %421 = vmatprep.subr.mxu0 0.0
    %422 = vmatpush1.msra.mxu0 %v73
    %423 = vmatprep.subr.mxu0 0.0
    %424 = vmatpush1.msra.mxu0 %v72
    %425 = vmatprep.subr.mxu0 0.0
    %426 = vmatpush1.msra.mxu0 %v71
    %427 = vmatprep.subr.mxu0 0.0
    %428 = vmatpush2.msra.mxu0 0.0
    %429 = vmatprep.subr.mxu0 0.0
    %430 = vmatpush2.msra.mxu0 0.0
    %431 = vmatprep.subr.mxu0 0.0
    %432 = vmatpush2.msra.mxu0 0.0
    %433 = vmatprep.subr.mxu0 0.0
    %434 = vmatpush2.msra.mxu0 0.0
    %435 = vmatprep.subr.mxu0 0.0
    %436 = vmatpush2.msra.mxu0 0.0
    %437 = vmatprep.subr.mxu0 0.0
    %438 = vmatpush2.msra.mxu0 0.0
    %439 = vmatprep.subr.mxu0 0.0
    %440 = vmatpush2.msra.mxu0 0.0
    %441 = vmatprep.subr.mxu0 0.0
    %442 = vmatpush2.msra.mxu0 0.0
    %443 = vmatprep.subr.mxu0 0.0
    %444 = vmatpush2.msra.mxu0 0.0
    %445 = vmatprep.subr.mxu0 0.0
    %446 = vmatpush2.msra.mxu0 0.0
    %447 = vmatprep.subr.mxu0 0.0
    %448 = vmatpush2.msra.mxu0 0.0
    %449 = vmatprep.subr.mxu0 0.0
    %450 = vmatpush2.msra.mxu0 0.0
    %451 = vmatprep.subr.mxu0 0.0
    %452 = vmatpush2.msra.mxu0 0.0
    %453 = vmatprep.subr.mxu0 0.0
    %454 = vmatpush2.msra.mxu0 0.0
    %455 = vmatprep.subr.mxu0 0.0
    %456 = vmatpush2.msra.mxu0 0.0
    %457 = vmatprep.subr.mxu0 0.0
    %458 = vmatpush2.msra.mxu0 0.0
    %459 = vmatprep.mubr.f32.mxu0 0.0
    %460 = vmatmul.mubr.f32.gmra.mxu0 %v390
    %v461 = vpop.f32.mrf.mxu0
    %v462 = vadd.f32 0.0, %v461
    %v463 = vpop.f32.mrf.mxu0
    %464 = vdwg.mxu0
    %v465 = vadd.f32 %v394, %v462
    %v466 = vmul.f32 %v465, %v53
    %v467 = vtanh.pop %v466
    %v468 = vmul.f32 %v467, %v53
    %v469 = vadd.f32 %v468, %v54
    %470 = vrot.lane.b32.xlu0 %v469, 64
    %v471 = vpop.permute.xlu0 %470
    %v472 = vmul.f32 %v469, %v471
    %473 = vrot.lane.b32.xlu0 %v472, 32
    %v474 = vpop.permute.xlu0 %473
    %v475 = vsel %vm52, %v469, %v471
    %v476 = vsel %vm52, %v471, %v469
    %v477 = vmul.f32 %v475, %v388
    %v478 = vadd.f32 %v477, %v474
    %v479 = vtanh.pop %v478
    %v480 = vmul.f32 %v476, %v479
    %s481 = scalar_lea.vmem [#allocation3], 16
    %482 = vst [vmem:[%s481] sm:$0xff] %v480
    %s483 = scalar_lea.vmem [#allocation2], 24
    %v484 = vld [vmem:[%s483] sm:$0xff]
    %485 = vmatprep.subr.mxu0 0.0
    %486 = vmatpush1.msra.mxu0 %v86
    %487 = vmatprep.subr.mxu0 0.0
    %488 = vmatpush1.msra.mxu0 %v85
    %489 = vmatprep.subr.mxu0 0.0
    %490 = vmatpush1.msra.mxu0 %v84
    %491 = vmatprep.subr.mxu0 0.0
    %492 = vmatpush1.msra.mxu0 %v83
    %493 = vmatprep.subr.mxu0 0.0
    %494 = vmatpush1.msra.mxu0 %v82
    %495 = vmatprep.subr.mxu0 0.0
    %496 = vmatpush1.msra.mxu0 %v81
    %497 = vmatprep.subr.mxu0 0.0
    %498 = vmatpush1.msra.mxu0 %v80
    %499 = vmatprep.subr.mxu0 0.0
    %500 = vmatpush1.msra.mxu0 %v79
    %501 = vmatprep.subr.mxu0 0.0
    %502 = vmatpush1.msra.mxu0 %v78
    %503 = vmatprep.subr.mxu0 0.0
    %504 = vmatpush1.msra.mxu0 %v77
    %505 = vmatprep.subr.mxu0 0.0
    %506 = vmatpush1.msra.mxu0 %v76
    %507 = vmatprep.subr.mxu0 0.0
    %508 = vmatpush1.msra.mxu0 %v75
    %509 = vmatprep.subr.mxu0 0.0
    %510 = vmatpush1.msra.mxu0 %v74
    %511 = vmatprep.subr.mxu0 0.0
    %512 = vmatpush1.msra.mxu0 %v73
    %513 = vmatprep.subr.mxu0 0.0
    %514 = vmatpush1.msra.mxu0 %v72
    %515 = vmatprep.subr.mxu0 0.0
    %516 = vmatpush1.msra.mxu0 %v71
    %517 = vmatprep.subr.mxu0 0.0
    %518 = vmatpush2.msra.mxu0 0.0
    %519 = vmatprep.subr.mxu0 0.0
    %520 = vmatpush2.msra.mxu0 0.0
    %521 = vmatprep.subr.mxu0 0.0
    %522 = vmatpush2.msra.mxu0 0.0
    %523 = vmatprep.subr.mxu0 0.0
    %524 = vmatpush2.msra.mxu0 0.0
    %525 = vmatprep.subr.mxu0 0.0
    %526 = vmatpush2.msra.mxu0 0.0
    %527 = vmatprep.subr.mxu0 0.0
    %528 = vmatpush2.msra.mxu0 0.0
    %529 = vmatprep.subr.mxu0 0.0
    %530 = vmatpush2.msra.mxu0 0.0
    %531 = vmatprep.subr.mxu0 0.0
    %532 = vmatpush2.msra.mxu0 0.0
    %533 = vmatprep.subr.mxu0 0.0
    %534 = vmatpush2.msra.mxu0 0.0
    %535 = vmatprep.subr.mxu0 0.0
    %536 = vmatpush2.msra.mxu0 0.0
    %537 = vmatprep.subr.mxu0 0.0
    %538 = vmatpush2.msra.mxu0 0.0
    %539 = vmatprep.subr.mxu0 0.0
    %540 = vmatpush2.msra.mxu0 0.0
    %541 = vmatprep.subr.mxu0 0.0
    %542 = vmatpush2.msra.mxu0 0.0
    %543 = vmatprep.subr.mxu0 0.0
    %544 = vmatpush2.msra.mxu0 0.0
    %545 = vmatprep.subr.mxu0 0.0
    %546 = vmatpush2.msra.mxu0 0.0
    %547 = vmatprep.subr.mxu0 0.0
    %548 = vmatpush2.msra.mxu0 0.0
    %549 = vmatprep.mubr.f32.mxu0 0.0
    %550 = vmatmul.mubr.f32.gmra.mxu0 %v480
    %v551 = vpop.f32.mrf.mxu0
    %v552 = vadd.f32 0.0, %v551
    %v553 = vpop.f32.mrf.mxu0
    %554 = vdwg.mxu0
    %v555 = vadd.f32 %v484, %v552
    %v556 = vmul.f32 %v555, %v53
    %v557 = vtanh.pop %v556
    %v558 = vmul.f32 %v557, %v53
    %v559 = vadd.f32 %v558, %v54
    %560 = vrot.lane.b32.xlu0 %v559, 64
    %v561 = vpop.permute.xlu0 %560
    %v562 = vmul.f32 %v559, %v561
    %563 = vrot.lane.b32.xlu0 %v562, 32
    %v564 = vpop.permute.xlu0 %563
    %v565 = vsel %vm52, %v559, %v561
    %v566 = vsel %vm52, %v561, %v559
    %v567 = vmul.f32 %v565, %v478
    %v568 = vadd.f32 %v567, %v564
    %v569 = vtanh.pop %v568
    %v570 = vmul.f32 %v566, %v569
    %s571 = scalar_lea.vmem [#allocation3], 24
    %572 = vst [vmem:[%s571] sm:$0xff] %v570
    %s573 = scalar_lea.vmem [#allocation2], 32
    %v574 = vld [vmem:[%s573] sm:$0xff]
    %575 = vmatprep.subr.mxu0 0.0
    %576 = vmatpush1.msra.mxu0 %v86
    %577 = vmatprep.subr.mxu0 0.0
    %578 = vmatpush1.msra.mxu0 %v85
    %579 = vmatprep.subr.mxu0 0.0
    %580 = vmatpush1.msra.mxu0 %v84
    %581 = vmatprep.subr.mxu0 0.0
    %582 = vmatpush1.msra.mxu0 %v83
    %583 = vmatprep.subr.mxu0 0.0
    %584 = vmatpush1.msra.mxu0 %v82
    %585 = vmatprep.subr.mxu0 0.0
    %586 = vmatpush1.msra.mxu0 %v81
    %587 = vmatprep.subr.mxu0 0.0
    %588 = vmatpush1.msra.mxu0 %v80
    %589 = vmatprep.subr.mxu0 0.0
    %590 = vmatpush1.msra.mxu0 %v79
    %591 = vmatprep.subr.mxu0 0.0
    %592 = vmatpush1.msra.mxu0 %v78
    %593 = vmatprep.subr.mxu0 0.0
    %594 = vmatpush1.msra.mxu0 %v77
    %595 = vmatprep.subr.mxu0 0.0
    %596 = vmatpush1.msra.mxu0 %v76
    %597 = vmatprep.subr.mxu0 0.0
    %598 = vmatpush1.msra.mxu0 %v75
    %599 = vmatprep.subr.mxu0 0.0
    %600 = vmatpush1.msra.mxu0 %v74
    %601 = vmatprep.subr.mxu0 0.0
    %602 = vmatpush1.msra.mxu0 %v73
    %603 = vmatprep.subr.mxu0 0.0
    %604 = vmatpush1.msra.mxu0 %v72
    %605 = vmatprep.subr.mxu0 0.0
    %606 = vmatpush1.msra.mxu0 %v71
    %607 = vmatprep.subr.mxu0 0.0
    %608 = vmatpush2.msra.mxu0 0.0
    %609 = vmatprep.subr.mxu0 0.0
    %610 = vmatpush2.msra.mxu0 0.0
    %611 = vmatprep.subr.mxu0 0.0
    %612 = vmatpush2.msra.mxu0 0.0
    %613 = vmatprep.subr.mxu0 0.0
    %614 = vmatpush2.msra.mxu0 0.0
    %615 = vmatprep.subr.mxu0 0.0
    %616 = vmatpush2.msra.mxu0 0.0
    %617 = vmatprep.subr.mxu0 0.0
    %618 = vmatpush2.msra.mxu0 0.0
    %619 = vmatprep.subr.mxu0 0.0
    %620 = vmatpush2.msra.mxu0 0.0
    %621 = vmatprep.subr.mxu0 0.0
    %622 = vmatpush2.msra.mxu0 0.0
    %623 = vmatprep.subr.mxu0 0.0
    %624 = vmatpush2.msra.mxu0 0.0
    %625 = vmatprep.subr.mxu0 0.0
    %626 = vmatpush2.msra.mxu0 0.0
    %627 = vmatprep.subr.mxu0 0.0
    %628 = vmatpush2.msra.mxu0 0.0
    %629 = vmatprep.subr.mxu0 0.0
    %630 = vmatpush2.msra.mxu0 0.0
    %631 = vmatprep.subr.mxu0 0.0
    %632 = vmatpush2.msra.mxu0 0.0
    %633 = vmatprep.subr.mxu0 0.0
    %634 = vmatpush2.msra.mxu0 0.0
    %635 = vmatprep.subr.mxu0 0.0
    %636 = vmatpush2.msra.mxu0 0.0
    %637 = vmatprep.subr.mxu0 0.0
    %638 = vmatpush2.msra.mxu0 0.0
    %639 = vmatprep.mubr.f32.mxu0 0.0
    %640 = vmatmul.mubr.f32.gmra.mxu0 %v570
    %v641 = vpop.f32.mrf.mxu0
    %v642 = vadd.f32 0.0, %v641
    %v643 = vpop.f32.mrf.mxu0
    %644 = vdwg.mxu0
    %v645 = vadd.f32 %v574, %v642
    %v646 = vmul.f32 %v645, %v53
    %v647 = vtanh.pop %v646
    %v648 = vmul.f32 %v647, %v53
    %v649 = vadd.f32 %v648, %v54
    %650 = vrot.lane.b32.xlu0 %v649, 64
    %v651 = vpop.permute.xlu0 %650
    %v652 = vmul.f32 %v649, %v651
    %653 = vrot.lane.b32.xlu0 %v652, 32
    %v654 = vpop.permute.xlu0 %653
    %v655 = vsel %vm52, %v649, %v651
    %v656 = vsel %vm52, %v651, %v649
    %v657 = vmul.f32 %v655, %v568
    %v658 = vadd.f32 %v657, %v654
    %v659 = vtanh.pop %v658
    %v660 = vmul.f32 %v656, %v659
    %s661 = scalar_lea.vmem [#allocation3], 32
    %662 = vst [vmem:[%s661] sm:$0xff] %v660
    %s663 = scalar_lea.vmem [#allocation2], 40
    %v664 = vld [vmem:[%s663] sm:$0xff]
    %665 = vmatprep.subr.mxu0 0.0
    %666 = vmatpush1.msra.mxu0 %v86
    %667 = vmatprep.subr.mxu0 0.0
    %668 = vmatpush1.msra.mxu0 %v85
    %669 = vmatprep.subr.mxu0 0.0
    %670 = vmatpush1.msra.mxu0 %v84
    %671 = vmatprep.subr.mxu0 0.0
    %672 = vmatpush1.msra.mxu0 %v83
    %673 = vmatprep.subr.mxu0 0.0
    %674 = vmatpush1.msra.mxu0 %v82
    %675 = vmatprep.subr.mxu0 0.0
    %676 = vmatpush1.msra.mxu0 %v81
    %677 = vmatprep.subr.mxu0 0.0
    %678 = vmatpush1.msra.mxu0 %v80
    %679 = vmatprep.subr.mxu0 0.0
    %680 = vmatpush1.msra.mxu0 %v79
    %681 = vmatprep.subr.mxu0 0.0
    %682 = vmatpush1.msra.mxu0 %v78
    %683 = vmatprep.subr.mxu0 0.0
    %684 = vmatpush1.msra.mxu0 %v77
    %685 = vmatprep.subr.mxu0 0.0
    %686 = vmatpush1.msra.mxu0 %v76
    %687 = vmatprep.subr.mxu0 0.0
    %688 = vmatpush1.msra.mxu0 %v75
    %689 = vmatprep.subr.mxu0 0.0
    %690 = vmatpush1.msra.mxu0 %v74
    %691 = vmatprep.subr.mxu0 0.0
    %692 = vmatpush1.msra.mxu0 %v73
    %693 = vmatprep.subr.mxu0 0.0
    %694 = vmatpush1.msra.mxu0 %v72
    %695 = vmatprep.subr.mxu0 0.0
    %696 = vmatpush1.msra.mxu0 %v71
    %697 = vmatprep.subr.mxu0 0.0
    %698 = vmatpush2.msra.mxu0 0.0
    %699 = vmatprep.subr.mxu0 0.0
    %700 = vmatpush2.msra.mxu0 0.0
    %701 = vmatprep.subr.mxu0 0.0
    %702 = vmatpush2.msra.mxu0 0.0
    %703 = vmatprep.subr.mxu0 0.0
    %704 = vmatpush2.msra.mxu0 0.0
    %705 = vmatprep.subr.mxu0 0.0
    %706 = vmatpush2.msra.mxu0 0.0
    %707 = vmatprep.subr.mxu0 0.0
    %708 = vmatpush2.msra.mxu0 0.0
    %709 = vmatprep.subr.mxu0 0.0
    %710 = vmatpush2.msra.mxu0 0.0
    %711 = vmatprep.subr.mxu0 0.0
    %712 = vmatpush2.msra.mxu0 0.0
    %713 = vmatprep.subr.mxu0 0.0
    %714 = vmatpush2.msra.mxu0 0.0
    %715 = vmatprep.subr.mxu0 0.0
    %716 = vmatpush2.msra.mxu0 0.0
    %717 = vmatprep.subr.mxu0 0.0
    %718 = vmatpush2.msra.mxu0 0.0
    %719 = vmatprep.subr.mxu0 0.0
    %720 = vmatpush2.msra.mxu0 0.0
    %721 = vmatprep.subr.mxu0 0.0
    %722 = vmatpush2.msra.mxu0 0.0
    %723 = vmatprep.subr.mxu0 0.0
    %724 = vmatpush2.msra.mxu0 0.0
    %725 = vmatprep.subr.mxu0 0.0
    %726 = vmatpush2.msra.mxu0 0.0
    %727 = vmatprep.subr.mxu0 0.0
    %728 = vmatpush2.msra.mxu0 0.0
    %729 = vmatprep.mubr.f32.mxu0 0.0
    %730 = vmatmul.mubr.f32.gmra.mxu0 %v660
    %v731 = vpop.f32.mrf.mxu0
    %v732 = vadd.f32 0.0, %v731
    %v733 = vpop.f32.mrf.mxu0
    %734 = vdwg.mxu0
    %v735 = vadd.f32 %v664, %v732
    %v736 = vmul.f32 %v735, %v53
    %v737 = vtanh.pop %v736
    %v738 = vmul.f32 %v737, %v53
    %v739 = vadd.f32 %v738, %v54
    %740 = vrot.lane.b32.xlu0 %v739, 64
    %v741 = vpop.permute.xlu0 %740
    %v742 = vmul.f32 %v739, %v741
    %743 = vrot.lane.b32.xlu0 %v742, 32
    %v744 = vpop.permute.xlu0 %743
    %v745 = vsel %vm52, %v739, %v741
    %v746 = vsel %vm52, %v741, %v739
    %v747 = vmul.f32 %v745, %v658
    %v748 = vadd.f32 %v747, %v744
    %v749 = vtanh.pop %v748
    %v750 = vmul.f32 %v746, %v749
    %s751 = scalar_lea.vmem [#allocation3], 40
    %752 = vst [vmem:[%s751] sm:$0xff] %v750
    %s753 = scalar_lea.vmem [#allocation2], 48
    %v754 = vld [vmem:[%s753] sm:$0xff]
    %755 = vmatprep.subr.mxu0 0.0
    %756 = vmatpush1.msra.mxu0 %v86
    %757 = vmatprep.subr.mxu0 0.0
    %758 = vmatpush1.msra.mxu0 %v85
    %759 = vmatprep.subr.mxu0 0.0
    %760 = vmatpush1.msra.mxu0 %v84
    %761 = vmatprep.subr.mxu0 0.0
    %762 = vmatpush1.msra.mxu0 %v83
    %763 = vmatprep.subr.mxu0 0.0
    %764 = vmatpush1.msra.mxu0 %v82
    %765 = vmatprep.subr.mxu0 0.0
    %766 = vmatpush1.msra.mxu0 %v81
    %767 = vmatprep.subr.mxu0 0.0
    %768 = vmatpush1.msra.mxu0 %v80
    %769 = vmatprep.subr.mxu0 0.0
    %770 = vmatpush1.msra.mxu0 %v79
    %771 = vmatprep.subr.mxu0 0.0
    %772 = vmatpush1.msra.mxu0 %v78
    %773 = vmatprep.subr.mxu0 0.0
    %774 = vmatpush1.msra.mxu0 %v77
    %775 = vmatprep.subr.mxu0 0.0
    %776 = vmatpush1.msra.mxu0 %v76
    %777 = vmatprep.subr.mxu0 0.0
    %778 = vmatpush1.msra.mxu0 %v75
    %779 = vmatprep.subr.mxu0 0.0
    %780 = vmatpush1.msra.mxu0 %v74
    %781 = vmatprep.subr.mxu0 0.0
    %782 = vmatpush1.msra.mxu0 %v73
    %783 = vmatprep.subr.mxu0 0.0
    %784 = vmatpush1.msra.mxu0 %v72
    %785 = vmatprep.subr.mxu0 0.0
    %786 = vmatpush1.msra.mxu0 %v71
    %787 = vmatprep.subr.mxu0 0.0
    %788 = vmatpush2.msra.mxu0 0.0
    %789 = vmatprep.subr.mxu0 0.0
    %790 = vmatpush2.msra.mxu0 0.0
    %791 = vmatprep.subr.mxu0 0.0
    %792 = vmatpush2.msra.mxu0 0.0
    %793 = vmatprep.subr.mxu0 0.0
    %794 = vmatpush2.msra.mxu0 0.0
    %795 = vmatprep.subr.mxu0 0.0
    %796 = vmatpush2.msra.mxu0 0.0
    %797 = vmatprep.subr.mxu0 0.0
    %798 = vmatpush2.msra.mxu0 0.0
    %799 = vmatprep.subr.mxu0 0.0
    %800 = vmatpush2.msra.mxu0 0.0
    %801 = vmatprep.subr.mxu0 0.0
    %802 = vmatpush2.msra.mxu0 0.0
    %803 = vmatprep.subr.mxu0 0.0
    %804 = vmatpush2.msra.mxu0 0.0
    %805 = vmatprep.subr.mxu0 0.0
    %806 = vmatpush2.msra.mxu0 0.0
    %807 = vmatprep.subr.mxu0 0.0
    %808 = vmatpush2.msra.mxu0 0.0
    %809 = vmatprep.subr.mxu0 0.0
    %810 = vmatpush2.msra.mxu0 0.0
    %811 = vmatprep.subr.mxu0 0.0
    %812 = vmatpush2.msra.mxu0 0.0
    %813 = vmatprep.subr.mxu0 0.0
    %814 = vmatpush2.msra.mxu0 0.0
    %815 = vmatprep.subr.mxu0 0.0
    %816 = vmatpush2.msra.mxu0 0.0
    %817 = vmatprep.subr.mxu0 0.0
    %818 = vmatpush2.msra.mxu0 0.0
    %819 = vmatprep.mubr.f32.mxu0 0.0
    %820 = vmatmul.mubr.f32.gmra.mxu0 %v750
    %v821 = vpop.f32.mrf.mxu0
    %v822 = vadd.f32 0.0, %v821
    %v823 = vpop.f32.mrf.mxu0
    %824 = vdwg.mxu0
    %v825 = vadd.f32 %v754, %v822
    %v826 = vmul.f32 %v825, %v53
    %v827 = vtanh.pop %v826
    %v828 = vmul.f32 %v827, %v53
    %v829 = vadd.f32 %v828, %v54
    %830 = vrot.lane.b32.xlu0 %v829, 64
    %v831 = vpop.permute.xlu0 %830
    %v832 = vmul.f32 %v829, %v831
    %833 = vrot.lane.b32.xlu0 %v832, 32
    %v834 = vpop.permute.xlu0 %833
    %v835 = vsel %vm52, %v829, %v831
    %v836 = vsel %vm52, %v831, %v829
    %v837 = vmul.f32 %v835, %v748
    %v838 = vadd.f32 %v837, %v834
    %v839 = vtanh.pop %v838
    %v840 = vmul.f32 %v836, %v839
    %s841 = scalar_lea.vmem [#allocation3], 48
    %842 = vst [vmem:[%s841] sm:$0xff] %v840
    %s843 = scalar_lea.vmem [#allocation2], 56
    %v844 = vld [vmem:[%s843] sm:$0xff]
    %845 = vmatprep.subr.mxu0 0.0
    %846 = vmatpush1.msra.mxu0 %v86
    %847 = vmatprep.subr.mxu0 0.0
    %848 = vmatpush1.msra.mxu0 %v85
    %849 = vmatprep.subr.mxu0 0.0
    %850 = vmatpush1.msra.mxu0 %v84
    %851 = vmatprep.subr.mxu0 0.0
    %852 = vmatpush1.msra.mxu0 %v83
    %853 = vmatprep.subr.mxu0 0.0
    %854 = vmatpush1.msra.mxu0 %v82
    %855 = vmatprep.subr.mxu0 0.0
    %856 = vmatpush1.msra.mxu0 %v81
    %857 = vmatprep.subr.mxu0 0.0
    %858 = vmatpush1.msra.mxu0 %v80
    %859 = vmatprep.subr.mxu0 0.0
    %860 = vmatpush1.msra.mxu0 %v79
    %861 = vmatprep.subr.mxu0 0.0
    %862 = vmatpush1.msra.mxu0 %v78
    %863 = vmatprep.subr.mxu0 0.0
    %864 = vmatpush1.msra.mxu0 %v77
    %865 = vmatprep.subr.mxu0 0.0
    %866 = vmatpush1.msra.mxu0 %v76
    %867 = vmatprep.subr.mxu0 0.0
    %868 = vmatpush1.msra.mxu0 %v75
    %869 = vmatprep.subr.mxu0 0.0
    %870 = vmatpush1.msra.mxu0 %v74
    %871 = vmatprep.subr.mxu0 0.0
    %872 = vmatpush1.msra.mxu0 %v73
    %873 = vmatprep.subr.mxu0 0.0
    %874 = vmatpush1.msra.mxu0 %v72
    %875 = vmatprep.subr.mxu0 0.0
    %876 = vmatpush1.msra.mxu0 %v71
    %877 = vmatprep.subr.mxu0 0.0
    %878 = vmatpush2.msra.mxu0 0.0
    %879 = vmatprep.subr.mxu0 0.0
    %880 = vmatpush2.msra.mxu0 0.0
    %881 = vmatprep.subr.mxu0 0.0
    %882 = vmatpush2.msra.mxu0 0.0
    %883 = vmatprep.subr.mxu0 0.0
    %884 = vmatpush2.msra.mxu0 0.0
    %885 = vmatprep.subr.mxu0 0.0
    %886 = vmatpush2.msra.mxu0 0.0
    %887 = vmatprep.subr.mxu0 0.0
    %888 = vmatpush2.msra.mxu0 0.0
    %889 = vmatprep.subr.mxu0 0.0
    %890 = vmatpush2.msra.mxu0 0.0
    %891 = vmatprep.subr.mxu0 0.0
    %892 = vmatpush2.msra.mxu0 0.0
    %893 = vmatprep.subr.mxu0 0.0
    %894 = vmatpush2.msra.mxu0 0.0
    %895 = vmatprep.subr.mxu0 0.0
    %896 = vmatpush2.msra.mxu0 0.0
    %897 = vmatprep.subr.mxu0 0.0
    %898 = vmatpush2.msra.mxu0 0.0
    %899 = vmatprep.subr.mxu0 0.0
    %900 = vmatpush2.msra.mxu0 0.0
    %901 = vmatprep.subr.mxu0 0.0
    %902 = vmatpush2.msra.mxu0 0.0
    %903 = vmatprep.subr.mxu0 0.0
    %904 = vmatpush2.msra.mxu0 0.0
    %905 = vmatprep.subr.mxu0 0.0
    %906 = vmatpush2.msra.mxu0 0.0
    %907 = vmatprep.subr.mxu0 0.0
    %908 = vmatpush2.msra.mxu0 0.0
    %909 = vmatprep.mubr.f32.mxu0 0.0
    %910 = vmatmul.mubr.f32.gmra.mxu0 %v840
    %v911 = vpop.f32.mrf.mxu0
    %v912 = vadd.f32 0.0, %v911
    %v913 = vpop.f32.mrf.mxu0
    %914 = vdwg.mxu0
    %v915 = vadd.f32 %v844, %v912
    %v916 = vmul.f32 %v915, %v53
    %v917 = vtanh.pop %v916
    %v918 = vmul.f32 %v917, %v53
    %v919 = vadd.f32 %v918, %v54
    %920 = vrot.lane.b32.xlu0 %v919, 64
    %v921 = vpop.permute.xlu0 %920
    %v922 = vmul.f32 %v919, %v921
    %923 = vrot.lane.b32.xlu0 %v922, 32
    %v924 = vpop.permute.xlu0 %923
    %v925 = vsel %vm52, %v919, %v921
    %v926 = vsel %vm52, %v921, %v919
    %v927 = vmul.f32 %v925, %v838
    %v928 = vadd.f32 %v927, %v924
    %v929 = vtanh.pop %v928
    %v930 = vmul.f32 %v926, %v929
    %s931 = scalar_lea.vmem [#allocation3], 56
    %932 = vst [vmem:[%s931] sm:$0xff] %v930
    %s933 = scalar_lea.vmem [#allocation4], 128
    %v934 = vld [vmem:[%s933] sm:$0xff]
    %v935 = vld [vmem:[%s933 + $0x8] sm:$0xff]
    %v936 = vld [vmem:[%s933 + $0x10] sm:$0xff]
    %v937 = vld [vmem:[%s933 + $0x18] sm:$0xff]
    %v938 = vld [vmem:[%s933 + $0x20] sm:$0xff]
    %v939 = vld [vmem:[%s933 + $0x28] sm:$0xff]
    %v940 = vld [vmem:[%s933 + $0x30] sm:$0xff]
    %v941 = vld [vmem:[%s933 + $0x38] sm:$0xff]
    %v942 = vld [vmem:[%s933 + $0x40] sm:$0xff]
    %v943 = vld [vmem:[%s933 + $0x48] sm:$0xff]
    %v944 = vld [vmem:[%s933 + $0x50] sm:$0xff]
    %v945 = vld [vmem:[%s933 + $0x58] sm:$0xff]
    %v946 = vld [vmem:[%s933 + $0x60] sm:$0xff]
    %v947 = vld [vmem:[%s933 + $0x68] sm:$0xff]
    %v948 = vld [vmem:[%s933 + $0x70] sm:$0xff]
    %v949 = vld [vmem:[%s933 + $0x78] sm:$0xff]
    %s950 = scalar_lea.vmem [#allocation6], 128
    %v951 = vld [vmem:[%s950] sm:$0xff]
    %v952 = vld [vmem:[%s950 + $0x8] sm:$0xff]
    %v953 = vld [vmem:[%s950 + $0x10] sm:$0xff]
    %v954 = vld [vmem:[%s950 + $0x18] sm:$0xff]
    %v955 = vld [vmem:[%s950 + $0x20] sm:$0xff]
    %v956 = vld [vmem:[%s950 + $0x28] sm:$0xff]
    %v957 = vld [vmem:[%s950 + $0x30] sm:$0xff]
    %v958 = vld [vmem:[%s950 + $0x38] sm:$0xff]
    %v959 = vld [vmem:[%s950 + $0x40] sm:$0xff]
    %v960 = vld [vmem:[%s950 + $0x48] sm:$0xff]
    %v961 = vld [vmem:[%s950 + $0x50] sm:$0xff]
    %v962 = vld [vmem:[%s950 + $0x58] sm:$0xff]
    %v963 = vld [vmem:[%s950 + $0x60] sm:$0xff]
    %v964 = vld [vmem:[%s950 + $0x68] sm:$0xff]
    %v965 = vld [vmem:[%s950 + $0x70] sm:$0xff]
    %v966 = vld [vmem:[%s950 + $0x78] sm:$0xff]
    %s967 = scalar_lea.vmem %s3, 1
    %v968 = vld [vmem:[%s967] sm:$0x1]
    %v969 = vld [vmem:[#allocation3] sm:$0xff]
    %v970 = vld [vmem:[#allocation3 + $0x8] sm:$0xff]
    %v971 = vld [vmem:[#allocation3 + $0x10] sm:$0xff]
    %v972 = vld [vmem:[#allocation3 + $0x18] sm:$0xff]
    %v973 = vld [vmem:[#allocation3 + $0x20] sm:$0xff]
    %v974 = vld [vmem:[#allocation3 + $0x28] sm:$0xff]
    %v975 = vld [vmem:[#allocation3 + $0x30] sm:$0xff]
    %v976 = vld [vmem:[#allocation3 + $0x38] sm:$0xff]
    %v978 = vlaneseq
    %v979 = vshrl.u32 %v978, 7
    %v980 = vsub.s32 0, %v979
    %v981 = vrot.slane %v968, %v980
    %983 = vmatprep.subr.mxu0 0.0
    %984 = vmatpush1.msra.mxu0 %v949
    %985 = vmatprep.subr.mxu0 0.0
    %986 = vmatpush1.msra.mxu0 %v948
    %987 = vmatprep.subr.mxu0 0.0
    %988 = vmatpush1.msra.mxu0 %v947
    %989 = vmatprep.subr.mxu0 0.0
    %990 = vmatpush1.msra.mxu0 %v946
    %991 = vmatprep.subr.mxu0 0.0
    %992 = vmatpush1.msra.mxu0 %v945
    %993 = vmatprep.subr.mxu0 0.0
    %994 = vmatpush1.msra.mxu0 %v944
    %995 = vmatprep.subr.mxu0 0.0
    %996 = vmatpush1.msra.mxu0 %v943
    %997 = vmatprep.subr.mxu0 0.0
    %998 = vmatpush1.msra.mxu0 %v942
    %999 = vmatprep.subr.mxu0 0.0
    %1000 = vmatpush1.msra.mxu0 %v941
    %1001 = vmatprep.subr.mxu0 0.0
    %1002 = vmatpush1.msra.mxu0 %v940
    %1003 = vmatprep.subr.mxu0 0.0
    %1004 = vmatpush1.msra.mxu0 %v939
    %1005 = vmatprep.subr.mxu0 0.0
    %1006 = vmatpush1.msra.mxu0 %v938
    %1007 = vmatprep.subr.mxu0 0.0
    %1008 = vmatpush1.msra.mxu0 %v937
    %1009 = vmatprep.subr.mxu0 0.0
    %1010 = vmatpush1.msra.mxu0 %v936
    %1011 = vmatprep.subr.mxu0 0.0
    %1012 = vmatpush1.msra.mxu0 %v935
    %1013 = vmatprep.subr.mxu0 0.0
    %1014 = vmatpush1.msra.mxu0 %v934
    %1015 = vmatprep.subr.mxu0 0.0
    %1016 = vmatpush2.msra.mxu0 0.0
    %1017 = vmatprep.subr.mxu0 0.0
    %1018 = vmatpush2.msra.mxu0 0.0
    %1019 = vmatprep.subr.mxu0 0.0
    %1020 = vmatpush2.msra.mxu0 0.0
    %1021 = vmatprep.subr.mxu0 0.0
    %1022 = vmatpush2.msra.mxu0 0.0
    %1023 = vmatprep.subr.mxu0 0.0
    %1024 = vmatpush2.msra.mxu0 0.0
    %1025 = vmatprep.subr.mxu0 0.0
    %1026 = vmatpush2.msra.mxu0 0.0
    %1027 = vmatprep.subr.mxu0 0.0
    %1028 = vmatpush2.msra.mxu0 0.0
    %1029 = vmatprep.subr.mxu0 0.0
    %1030 = vmatpush2.msra.mxu0 0.0
    %1031 = vmatprep.subr.mxu0 0.0
    %1032 = vmatpush2.msra.mxu0 0.0
    %1033 = vmatprep.subr.mxu0 0.0
    %1034 = vmatpush2.msra.mxu0 0.0
    %1035 = vmatprep.subr.mxu0 0.0
    %1036 = vmatpush2.msra.mxu0 0.0
    %1037 = vmatprep.subr.mxu0 0.0
    %1038 = vmatpush2.msra.mxu0 0.0
    %1039 = vmatprep.subr.mxu0 0.0
    %1040 = vmatpush2.msra.mxu0 0.0
    %1041 = vmatprep.subr.mxu0 0.0
    %1042 = vmatpush2.msra.mxu0 0.0
    %1043 = vmatprep.subr.mxu0 0.0
    %1044 = vmatpush2.msra.mxu0 0.0
    %1045 = vmatprep.subr.mxu0 0.0
    %1046 = vmatpush2.msra.mxu0 0.0
    %1047 = vmatprep.mubr.f32.mxu0 0.0
    %1048 = vmatmul.mubr.f32.gmra.mxu0 %v969
    %v1049 = vpop.f32.mrf.mxu0
    %v1050 = vadd.f32 %v981, %v1049
    %v1051 = vpop.f32.mrf.mxu0
    %1052 = vmatprep.mubr.f32.mxu0 0.0
    %1053 = vmatmul.mubr.f32.gmra.mxu0 %v970
    %v1054 = vpop.f32.mrf.mxu0
    %v1055 = vadd.f32 %v981, %v1054
    %v1056 = vpop.f32.mrf.mxu0
    %1057 = vmatprep.mubr.f32.mxu0 0.0
    %1058 = vmatmul.mubr.f32.gmra.mxu0 %v971
    %v1059 = vpop.f32.mrf.mxu0
    %v1060 = vadd.f32 %v981, %v1059
    %v1061 = vpop.f32.mrf.mxu0
    %1062 = vmatprep.mubr.f32.mxu0 0.0
    %1063 = vmatmul.mubr.f32.gmra.mxu0 %v972
    %v1064 = vpop.f32.mrf.mxu0
    %v1065 = vadd.f32 %v981, %v1064
    %v1066 = vpop.f32.mrf.mxu0
    %1067 = vmatprep.mubr.f32.mxu0 0.0
    %1068 = vmatmul.mubr.f32.gmra.mxu0 %v973
    %v1069 = vpop.f32.mrf.mxu0
    %v1070 = vadd.f32 %v981, %v1069
    %v1071 = vpop.f32.mrf.mxu0
    %1072 = vmatprep.mubr.f32.mxu0 0.0
    %1073 = vmatmul.mubr.f32.gmra.mxu0 %v974
    %v1074 = vpop.f32.mrf.mxu0
    %v1075 = vadd.f32 %v981, %v1074
    %v1076 = vpop.f32.mrf.mxu0
    %1077 = vmatprep.mubr.f32.mxu0 0.0
    %1078 = vmatmul.mubr.f32.gmra.mxu0 %v975
    %v1079 = vpop.f32.mrf.mxu0
    %v1080 = vadd.f32 %v981, %v1079
    %v1081 = vpop.f32.mrf.mxu0
    %1082 = vmatprep.mubr.f32.mxu0 0.0
    %1083 = vmatmul.mubr.f32.gmra.mxu0 %v976
    %v1084 = vpop.f32.mrf.mxu0
    %v1085 = vadd.f32 %v981, %v1084
    %v1086 = vpop.f32.mrf.mxu0
    %1087 = vdwg.mxu0
    %1088 = vst [vmem:[#allocation2] sm:$0xff] %v1050
    %1089 = vst [vmem:[#allocation2 + $0x8] sm:$0xff] %v1055
    %1090 = vst [vmem:[#allocation2 + $0x10] sm:$0xff] %v1060
    %1091 = vst [vmem:[#allocation2 + $0x18] sm:$0xff] %v1065
    %1092 = vst [vmem:[#allocation2 + $0x20] sm:$0xff] %v1070
    %1093 = vst [vmem:[#allocation2 + $0x28] sm:$0xff] %v1075
    %1094 = vst [vmem:[#allocation2 + $0x30] sm:$0xff] %v1080
    %1095 = vst [vmem:[#allocation2 + $0x38] sm:$0xff] %v1085
    %v1096 = vld [vmem:[#allocation2] sm:$0xff]
    %1097 = vmatprep.subr.mxu0 0.0
    %1098 = vmatpush1.msra.mxu0 %v966
    %1099 = vmatprep.subr.mxu0 0.0
    %1100 = vmatpush1.msra.mxu0 %v965
    %1101 = vmatprep.subr.mxu0 0.0
    %1102 = vmatpush1.msra.mxu0 %v964
    %1103 = vmatprep.subr.mxu0 0.0
    %1104 = vmatpush1.msra.mxu0 %v963
    %1105 = vmatprep.subr.mxu0 0.0
    %1106 = vmatpush1.msra.mxu0 %v962
    %1107 = vmatprep.subr.mxu0 0.0
    %1108 = vmatpush1.msra.mxu0 %v961
    %1109 = vmatprep.subr.mxu0 0.0
    %1110 = vmatpush1.msra.mxu0 %v960
    %1111 = vmatprep.subr.mxu0 0.0
    %1112 = vmatpush1.msra.mxu0 %v959
    %1113 = vmatprep.subr.mxu0 0.0
    %1114 = vmatpush1.msra.mxu0 %v958
    %1115 = vmatprep.subr.mxu0 0.0
    %1116 = vmatpush1.msra.mxu0 %v957
    %1117 = vmatprep.subr.mxu0 0.0
    %1118 = vmatpush1.msra.mxu0 %v956
    %1119 = vmatprep.subr.mxu0 0.0
    %1120 = vmatpush1.msra.mxu0 %v955
    %1121 = vmatprep.subr.mxu0 0.0
    %1122 = vmatpush1.msra.mxu0 %v954
    %1123 = vmatprep.subr.mxu0 0.0
    %1124 = vmatpush1.msra.mxu0 %v953
    %1125 = vmatprep.subr.mxu0 0.0
    %1126 = vmatpush1.msra.mxu0 %v952
    %1127 = vmatprep.subr.mxu0 0.0
    %1128 = vmatpush1.msra.mxu0 %v951
    %1129 = vmatprep.subr.mxu0 0.0
    %1130 = vmatpush2.msra.mxu0 0.0
    %1131 = vmatprep.subr.mxu0 0.0
    %1132 = vmatpush2.msra.mxu0 0.0
    %1133 = vmatprep.subr.mxu0 0.0
    %1134 = vmatpush2.msra.mxu0 0.0
    %1135 = vmatprep.subr.mxu0 0.0
    %1136 = vmatpush2.msra.mxu0 0.0
    %1137 = vmatprep.subr.mxu0 0.0
    %1138 = vmatpush2.msra.mxu0 0.0
    %1139 = vmatprep.subr.mxu0 0.0
    %1140 = vmatpush2.msra.mxu0 0.0
    %1141 = vmatprep.subr.mxu0 0.0
    %1142 = vmatpush2.msra.mxu0 0.0
    %1143 = vmatprep.subr.mxu0 0.0
    %1144 = vmatpush2.msra.mxu0 0.0
    %1145 = vmatprep.subr.mxu0 0.0
    %1146 = vmatpush2.msra.mxu0 0.0
    %1147 = vmatprep.subr.mxu0 0.0
    %1148 = vmatpush2.msra.mxu0 0.0
    %1149 = vmatprep.subr.mxu0 0.0
    %1150 = vmatpush2.msra.mxu0 0.0
    %1151 = vmatprep.subr.mxu0 0.0
    %1152 = vmatpush2.msra.mxu0 0.0
    %1153 = vmatprep.subr.mxu0 0.0
    %1154 = vmatpush2.msra.mxu0 0.0
    %1155 = vmatprep.subr.mxu0 0.0
    %1156 = vmatpush2.msra.mxu0 0.0
    %1157 = vmatprep.subr.mxu0 0.0
    %1158 = vmatpush2.msra.mxu0 0.0
    %1159 = vmatprep.subr.mxu0 0.0
    %1160 = vmatpush2.msra.mxu0 0.0
    %1161 = vmatprep.mubr.f32.mxu0 0.0
    %1162 = vmatmul.mubr.f32.gmra.mxu0 0.0
    %v1163 = vpop.f32.mrf.mxu0
    %v1164 = vadd.f32 0.0, %v1163
    %v1165 = vpop.f32.mrf.mxu0
    %1166 = vdwg.mxu0
    %v1167 = vadd.f32 %v1096, %v1164
    %v1168 = vmul.f32 %v1167, %v53
    %v1169 = vtanh.pop %v1168
    %v1170 = vmul.f32 %v1169, %v53
    %v1171 = vadd.f32 %v1170, %v54
    %1172 = vrot.lane.b32.xlu0 %v1171, 64
    %v1173 = vpop.permute.xlu0 %1172
    %v1174 = vmul.f32 %v1171, %v1173
    %1175 = vrot.lane.b32.xlu0 %v1174, 32
    %v1176 = vpop.permute.xlu0 %1175
    %v1177 = vsel %vm52, %v1171, %v1173
    %v1178 = vsel %vm52, %v1173, %v1171
    %v1179 = vmul.f32 %v1177, 0.0
    %v1180 = vadd.f32 %v1179, %v1176
    %v1181 = vtanh.pop %v1180
    %v1182 = vmul.f32 %v1178, %v1181
    %1183 = vst [vmem:[#allocation3] sm:$0xff] %v1182
    %v1184 = vld [vmem:[%s303] sm:$0xff]
    %1185 = vmatprep.subr.mxu0 0.0
    %1186 = vmatpush1.msra.mxu0 %v966
    %1187 = vmatprep.subr.mxu0 0.0
    %1188 = vmatpush1.msra.mxu0 %v965
    %1189 = vmatprep.subr.mxu0 0.0
    %1190 = vmatpush1.msra.mxu0 %v964
    %1191 = vmatprep.subr.mxu0 0.0
    %1192 = vmatpush1.msra.mxu0 %v963
    %1193 = vmatprep.subr.mxu0 0.0
    %1194 = vmatpush1.msra.mxu0 %v962
    %1195 = vmatprep.subr.mxu0 0.0
    %1196 = vmatpush1.msra.mxu0 %v961
    %1197 = vmatprep.subr.mxu0 0.0
    %1198 = vmatpush1.msra.mxu0 %v960
    %1199 = vmatprep.subr.mxu0 0.0
    %1200 = vmatpush1.msra.mxu0 %v959
    %1201 = vmatprep.subr.mxu0 0.0
    %1202 = vmatpush1.msra.mxu0 %v958
    %1203 = vmatprep.subr.mxu0 0.0
    %1204 = vmatpush1.msra.mxu0 %v957
    %1205 = vmatprep.subr.mxu0 0.0
    %1206 = vmatpush1.msra.mxu0 %v956
    %1207 = vmatprep.subr.mxu0 0.0
    %1208 = vmatpush1.msra.mxu0 %v955
    %1209 = vmatprep.subr.mxu0 0.0
    %1210 = vmatpush1.msra.mxu0 %v954
    %1211 = vmatprep.subr.mxu0 0.0
    %1212 = vmatpush1.msra.mxu0 %v953
    %1213 = vmatprep.subr.mxu0 0.0
    %1214 = vmatpush1.msra.mxu0 %v952
    %1215 = vmatprep.subr.mxu0 0.0
    %1216 = vmatpush1.msra.mxu0 %v951
    %1217 = vmatprep.subr.mxu0 0.0
    %1218 = vmatpush2.msra.mxu0 0.0
    %1219 = vmatprep.subr.mxu0 0.0
    %1220 = vmatpush2.msra.mxu0 0.0
    %1221 = vmatprep.subr.mxu0 0.0
    %1222 = vmatpush2.msra.mxu0 0.0
    %1223 = vmatprep.subr.mxu0 0.0
    %1224 = vmatpush2.msra.mxu0 0.0
    %1225 = vmatprep.subr.mxu0 0.0
    %1226 = vmatpush2.msra.mxu0 0.0
    %1227 = vmatprep.subr.mxu0 0.0
    %1228 = vmatpush2.msra.mxu0 0.0
    %1229 = vmatprep.subr.mxu0 0.0
    %1230 = vmatpush2.msra.mxu0 0.0
    %1231 = vmatprep.subr.mxu0 0.0
    %1232 = vmatpush2.msra.mxu0 0.0
    %1233 = vmatprep.subr.mxu0 0.0
    %1234 = vmatpush2.msra.mxu0 0.0
    %1235 = vmatprep.subr.mxu0 0.0
    %1236 = vmatpush2.msra.mxu0 0.0
    %1237 = vmatprep.subr.mxu0 0.0
    %1238 = vmatpush2.msra.mxu0 0.0
    %1239 = vmatprep.subr.mxu0 0.0
    %1240 = vmatpush2.msra.mxu0 0.0
    %1241 = vmatprep.subr.mxu0 0.0
    %1242 = vmatpush2.msra.mxu0 0.0
    %1243 = vmatprep.subr.mxu0 0.0
    %1244 = vmatpush2.msra.mxu0 0.0
    %1245 = vmatprep.subr.mxu0 0.0
    %1246 = vmatpush2.msra.mxu0 0.0
    %1247 = vmatprep.subr.mxu0 0.0
    %1248 = vmatpush2.msra.mxu0 0.0
    %1249 = vmatprep.mubr.f32.mxu0 0.0
    %1250 = vmatmul.mubr.f32.gmra.mxu0 %v1182
    %v1251 = vpop.f32.mrf.mxu0
    %v1252 = vadd.f32 0.0, %v1251
    %v1253 = vpop.f32.mrf.mxu0
    %1254 = vdwg.mxu0
    %v1255 = vadd.f32 %v1184, %v1252
    %v1256 = vmul.f32 %v1255, %v53
    %v1257 = vtanh.pop %v1256
    %v1258 = vmul.f32 %v1257, %v53
    %v1259 = vadd.f32 %v1258, %v54
    %1260 = vrot.lane.b32.xlu0 %v1259, 64
    %v1261 = vpop.permute.xlu0 %1260
    %v1262 = vmul.f32 %v1259, %v1261
    %1263 = vrot.lane.b32.xlu0 %v1262, 32
    %v1264 = vpop.permute.xlu0 %1263
    %v1265 = vsel %vm52, %v1259, %v1261
    %v1266 = vsel %vm52, %v1261, %v1259
    %v1267 = vmul.f32 %v1265, %v1180
    %v1268 = vadd.f32 %v1267, %v1264
    %v1269 = vtanh.pop %v1268
    %v1270 = vmul.f32 %v1266, %v1269
    %1271 = vst [vmem:[%s391] sm:$0xff] %v1270
    %v1272 = vld [vmem:[%s393] sm:$0xff]
    %1273 = vmatprep.subr.mxu0 0.0
    %1274 = vmatpush1.msra.mxu0 %v966
    %1275 = vmatprep.subr.mxu0 0.0
    %1276 = vmatpush1.msra.mxu0 %v965
    %1277 = vmatprep.subr.mxu0 0.0
    %1278 = vmatpush1.msra.mxu0 %v964
    %1279 = vmatprep.subr.mxu0 0.0
    %1280 = vmatpush1.msra.mxu0 %v963
    %1281 = vmatprep.subr.mxu0 0.0
    %1282 = vmatpush1.msra.mxu0 %v962
    %1283 = vmatprep.subr.mxu0 0.0
    %1284 = vmatpush1.msra.mxu0 %v961
    %1285 = vmatprep.subr.mxu0 0.0
    %1286 = vmatpush1.msra.mxu0 %v960
    %1287 = vmatprep.subr.mxu0 0.0
    %1288 = vmatpush1.msra.mxu0 %v959
    %1289 = vmatprep.subr.mxu0 0.0
    %1290 = vmatpush1.msra.mxu0 %v958
    %1291 = vmatprep.subr.mxu0 0.0
    %1292 = vmatpush1.msra.mxu0 %v957
    %1293 = vmatprep.subr.mxu0 0.0
    %1294 = vmatpush1.msra.mxu0 %v956
    %1295 = vmatprep.subr.mxu0 0.0
    %1296 = vmatpush1.msra.mxu0 %v955
    %1297 = vmatprep.subr.mxu0 0.0
    %1298 = vmatpush1.msra.mxu0 %v954
    %1299 = vmatprep.subr.mxu0 0.0
    %1300 = vmatpush1.msra.mxu0 %v953
    %1301 = vmatprep.subr.mxu0 0.0
    %1302 = vmatpush1.msra.mxu0 %v952
    %1303 = vmatprep.subr.mxu0 0.0
    %1304 = vmatpush1.msra.mxu0 %v951
    %1305 = vmatprep.subr.mxu0 0.0
    %1306 = vmatpush2.msra.mxu0 0.0
    %1307 = vmatprep.subr.mxu0 0.0
    %1308 = vmatpush2.msra.mxu0 0.0
    %1309 = vmatprep.subr.mxu0 0.0
    %1310 = vmatpush2.msra.mxu0 0.0
    %1311 = vmatprep.subr.mxu0 0.0
    %1312 = vmatpush2.msra.mxu0 0.0
    %1313 = vmatprep.subr.mxu0 0.0
    %1314 = vmatpush2.msra.mxu0 0.0
    %1315 = vmatprep.subr.mxu0 0.0
    %1316 = vmatpush2.msra.mxu0 0.0
    %1317 = vmatprep.subr.mxu0 0.0
    %1318 = vmatpush2.msra.mxu0 0.0
    %1319 = vmatprep.subr.mxu0 0.0
    %1320 = vmatpush2.msra.mxu0 0.0
    %1321 = vmatprep.subr.mxu0 0.0
    %1322 = vmatpush2.msra.mxu0 0.0
    %1323 = vmatprep.subr.mxu0 0.0
    %1324 = vmatpush2.msra.mxu0 0.0
    %1325 = vmatprep.subr.mxu0 0.0
    %1326 = vmatpush2.msra.mxu0 0.0
    %1327 = vmatprep.subr.mxu0 0.0
    %1328 = vmatpush2.msra.mxu0 0.0
    %1329 = vmatprep.subr.mxu0 0.0
    %1330 = vmatpush2.msra.mxu0 0.0
    %1331 = vmatprep.subr.mxu0 0.0
    %1332 = vmatpush2.msra.mxu0 0.0
    %1333 = vmatprep.subr.mxu0 0.0
    %1334 = vmatpush2.msra.mxu0 0.0
    %1335 = vmatprep.subr.mxu0 0.0
    %1336 = vmatpush2.msra.mxu0 0.0
    %1337 = vmatprep.mubr.f32.mxu0 0.0
    %1338 = vmatmul.mubr.f32.gmra.mxu0 %v1270
    %v1339 = vpop.f32.mrf.mxu0
    %v1340 = vadd.f32 0.0, %v1339
    %v1341 = vpop.f32.mrf.mxu0
    %1342 = vdwg.mxu0
    %v1343 = vadd.f32 %v1272, %v1340
    %v1344 = vmul.f32 %v1343, %v53
    %v1345 = vtanh.pop %v1344
    %v1346 = vmul.f32 %v1345, %v53
    %v1347 = vadd.f32 %v1346, %v54
    %1348 = vrot.lane.b32.xlu0 %v1347, 64
    %v1349 = vpop.permute.xlu0 %1348
    %v1350 = vmul.f32 %v1347, %v1349
    %1351 = vrot.lane.b32.xlu0 %v1350, 32
    %v1352 = vpop.permute.xlu0 %1351
    %v1353 = vsel %vm52, %v1347, %v1349
    %v1354 = vsel %vm52, %v1349, %v1347
    %v1355 = vmul.f32 %v1353, %v1268
    %v1356 = vadd.f32 %v1355, %v1352
    %v1357 = vtanh.pop %v1356
    %v1358 = vmul.f32 %v1354, %v1357
    %1359 = vst [vmem:[%s481] sm:$0xff] %v1358
    %v1360 = vld [vmem:[%s483] sm:$0xff]
    %1361 = vmatprep.subr.mxu0 0.0
    %1362 = vmatpush1.msra.mxu0 %v966
    %1363 = vmatprep.subr.mxu0 0.0
    %1364 = vmatpush1.msra.mxu0 %v965
    %1365 = vmatprep.subr.mxu0 0.0
    %1366 = vmatpush1.msra.mxu0 %v964
    %1367 = vmatprep.subr.mxu0 0.0
    %1368 = vmatpush1.msra.mxu0 %v963
    %1369 = vmatprep.subr.mxu0 0.0
    %1370 = vmatpush1.msra.mxu0 %v962
    %1371 = vmatprep.subr.mxu0 0.0
    %1372 = vmatpush1.msra.mxu0 %v961
    %1373 = vmatprep.subr.mxu0 0.0
    %1374 = vmatpush1.msra.mxu0 %v960
    %1375 = vmatprep.subr.mxu0 0.0
    %1376 = vmatpush1.msra.mxu0 %v959
    %1377 = vmatprep.subr.mxu0 0.0
    %1378 = vmatpush1.msra.mxu0 %v958
    %1379 = vmatprep.subr.mxu0 0.0
    %1380 = vmatpush1.msra.mxu0 %v957
    %1381 = vmatprep.subr.mxu0 0.0
    %1382 = vmatpush1.msra.mxu0 %v956
    %1383 = vmatprep.subr.mxu0 0.0
    %1384 = vmatpush1.msra.mxu0 %v955
    %1385 = vmatprep.subr.mxu0 0.0
    %1386 = vmatpush1.msra.mxu0 %v954
    %1387 = vmatprep.subr.mxu0 0.0
    %1388 = vmatpush1.msra.mxu0 %v953
    %1389 = vmatprep.subr.mxu0 0.0
    %1390 = vmatpush1.msra.mxu0 %v952
    %1391 = vmatprep.subr.mxu0 0.0
    %1392 = vmatpush1.msra.mxu0 %v951
    %1393 = vmatprep.subr.mxu0 0.0
    %1394 = vmatpush2.msra.mxu0 0.0
    %1395 = vmatprep.subr.mxu0 0.0
    %1396 = vmatpush2.msra.mxu0 0.0
    %1397 = vmatprep.subr.mxu0 0.0
    %1398 = vmatpush2.msra.mxu0 0.0
    %1399 = vmatprep.subr.mxu0 0.0
    %1400 = vmatpush2.msra.mxu0 0.0
    %1401 = vmatprep.subr.mxu0 0.0
    %1402 = vmatpush2.msra.mxu0 0.0
    %1403 = vmatprep.subr.mxu0 0.0
    %1404 = vmatpush2.msra.mxu0 0.0
    %1405 = vmatprep.subr.mxu0 0.0
    %1406 = vmatpush2.msra.mxu0 0.0
    %1407 = vmatprep.subr.mxu0 0.0
    %1408 = vmatpush2.msra.mxu0 0.0
    %1409 = vmatprep.subr.mxu0 0.0
    %1410 = vmatpush2.msra.mxu0 0.0
    %1411 = vmatprep.subr.mxu0 0.0
    %1412 = vmatpush2.msra.mxu0 0.0
    %1413 = vmatprep.subr.mxu0 0.0
    %1414 = vmatpush2.msra.mxu0 0.0
    %1415 = vmatprep.subr.mxu0 0.0
    %1416 = vmatpush2.msra.mxu0 0.0
    %1417 = vmatprep.subr.mxu0 0.0
    %1418 = vmatpush2.msra.mxu0 0.0
    %1419 = vmatprep.subr.mxu0 0.0
    %1420 = vmatpush2.msra.mxu0 0.0
    %1421 = vmatprep.subr.mxu0 0.0
    %1422 = vmatpush2.msra.mxu0 0.0
    %1423 = vmatprep.subr.mxu0 0.0
    %1424 = vmatpush2.msra.mxu0 0.0
    %1425 = vmatprep.mubr.f32.mxu0 0.0
    %1426 = vmatmul.mubr.f32.gmra.mxu0 %v1358
    %v1427 = vpop.f32.mrf.mxu0
    %v1428 = vadd.f32 0.0, %v1427
    %v1429 = vpop.f32.mrf.mxu0
    %1430 = vdwg.mxu0
    %v1431 = vadd.f32 %v1360, %v1428
    %v1432 = vmul.f32 %v1431, %v53
    %v1433 = vtanh.pop %v1432
    %v1434 = vmul.f32 %v1433, %v53
    %v1435 = vadd.f32 %v1434, %v54
    %1436 = vrot.lane.b32.xlu0 %v1435, 64
    %v1437 = vpop.permute.xlu0 %1436
    %v1438 = vmul.f32 %v1435, %v1437
    %1439 = vrot.lane.b32.xlu0 %v1438, 32
    %v1440 = vpop.permute.xlu0 %1439
    %v1441 = vsel %vm52, %v1435, %v1437
    %v1442 = vsel %vm52, %v1437, %v1435
    %v1443 = vmul.f32 %v1441, %v1356
    %v1444 = vadd.f32 %v1443, %v1440
    %v1445 = vtanh.pop %v1444
    %v1446 = vmul.f32 %v1442, %v1445
    %1447 = vst [vmem:[%s571] sm:$0xff] %v1446
    %v1448 = vld [vmem:[%s573] sm:$0xff]
    %1449 = vmatprep.subr.mxu0 0.0
    %1450 = vmatpush1.msra.mxu0 %v966
    %1451 = vmatprep.subr.mxu0 0.0
    %1452 = vmatpush1.msra.mxu0 %v965
    %1453 = vmatprep.subr.mxu0 0.0
    %1454 = vmatpush1.msra.mxu0 %v964
    %1455 = vmatprep.subr.mxu0 0.0
    %1456 = vmatpush1.msra.mxu0 %v963
    %1457 = vmatprep.subr.mxu0 0.0
    %1458 = vmatpush1.msra.mxu0 %v962
    %1459 = vmatprep.subr.mxu0 0.0
    %1460 = vmatpush1.msra.mxu0 %v961
    %1461 = vmatprep.subr.mxu0 0.0
    %1462 = vmatpush1.msra.mxu0 %v960
    %1463 = vmatprep.subr.mxu0 0.0
    %1464 = vmatpush1.msra.mxu0 %v959
    %1465 = vmatprep.subr.mxu0 0.0
    %1466 = vmatpush1.msra.mxu0 %v958
    %1467 = vmatprep.subr.mxu0 0.0
    %1468 = vmatpush1.msra.mxu0 %v957
    %1469 = vmatprep.subr.mxu0 0.0
    %1470 = vmatpush1.msra.mxu0 %v956
    %1471 = vmatprep.subr.mxu0 0.0
    %1472 = vmatpush1.msra.mxu0 %v955
    %1473 = vmatprep.subr.mxu0 0.0
    %1474 = vmatpush1.msra.mxu0 %v954
    %1475 = vmatprep.subr.mxu0 0.0
    %1476 = vmatpush1.msra.mxu0 %v953
    %1477 = vmatprep.subr.mxu0 0.0
    %1478 = vmatpush1.msra.mxu0 %v952
    %1479 = vmatprep.subr.mxu0 0.0
    %1480 = vmatpush1.msra.mxu0 %v951
    %1481 = vmatprep.subr.mxu0 0.0
    %1482 = vmatpush2.msra.mxu0 0.0
    %1483 = vmatprep.subr.mxu0 0.0
    %1484 = vmatpush2.msra.mxu0 0.0
    %1485 = vmatprep.subr.mxu0 0.0
    %1486 = vmatpush2.msra.mxu0 0.0
    %1487 = vmatprep.subr.mxu0 0.0
    %1488 = vmatpush2.msra.mxu0 0.0
    %1489 = vmatprep.subr.mxu0 0.0
    %1490 = vmatpush2.msra.mxu0 0.0
    %1491 = vmatprep.subr.mxu0 0.0
    %1492 = vmatpush2.msra.mxu0 0.0
    %1493 = vmatprep.subr.mxu0 0.0
    %1494 = vmatpush2.msra.mxu0 0.0
    %1495 = vmatprep.subr.mxu0 0.0
    %1496 = vmatpush2.msra.mxu0 0.0
    %1497 = vmatprep.subr.mxu0 0.0
    %1498 = vmatpush2.msra.mxu0 0.0
    %1499 = vmatprep.subr.mxu0 0.0
    %1500 = vmatpush2.msra.mxu0 0.0
    %1501 = vmatprep.subr.mxu0 0.0
    %1502 = vmatpush2.msra.mxu0 0.0
    %1503 = vmatprep.subr.mxu0 0.0
    %1504 = vmatpush2.msra.mxu0 0.0
    %1505 = vmatprep.subr.mxu0 0.0
    %1506 = vmatpush2.msra.mxu0 0.0
    %1507 = vmatprep.subr.mxu0 0.0
    %1508 = vmatpush2.msra.mxu0 0.0
    %1509 = vmatprep.subr.mxu0 0.0
    %1510 = vmatpush2.msra.mxu0 0.0
    %1511 = vmatprep.subr.mxu0 0.0
    %1512 = vmatpush2.msra.mxu0 0.0
    %1513 = vmatprep.mubr.f32.mxu0 0.0
    %1514 = vmatmul.mubr.f32.gmra.mxu0 %v1446
    %v1515 = vpop.f32.mrf.mxu0
    %v1516 = vadd.f32 0.0, %v1515
    %v1517 = vpop.f32.mrf.mxu0
    %1518 = vdwg.mxu0
    %v1519 = vadd.f32 %v1448, %v1516
    %v1520 = vmul.f32 %v1519, %v53
    %v1521 = vtanh.pop %v1520
    %v1522 = vmul.f32 %v1521, %v53
    %v1523 = vadd.f32 %v1522, %v54
    %1524 = vrot.lane.b32.xlu0 %v1523, 64
    %v1525 = vpop.permute.xlu0 %1524
    %v1526 = vmul.f32 %v1523, %v1525
    %1527 = vrot.lane.b32.xlu0 %v1526, 32
    %v1528 = vpop.permute.xlu0 %1527
    %v1529 = vsel %vm52, %v1523, %v1525
    %v1530 = vsel %vm52, %v1525, %v1523
    %v1531 = vmul.f32 %v1529, %v1444
    %v1532 = vadd.f32 %v1531, %v1528
    %v1533 = vtanh.pop %v1532
    %v1534 = vmul.f32 %v1530, %v1533
    %1535 = vst [vmem:[%s661] sm:$0xff] %v1534
    %v1536 = vld [vmem:[%s663] sm:$0xff]
    %1537 = vmatprep.subr.mxu0 0.0
    %1538 = vmatpush1.msra.mxu0 %v966
    %1539 = vmatprep.subr.mxu0 0.0
    %1540 = vmatpush1.msra.mxu0 %v965
    %1541 = vmatprep.subr.mxu0 0.0
    %1542 = vmatpush1.msra.mxu0 %v964
    %1543 = vmatprep.subr.mxu0 0.0
    %1544 = vmatpush1.msra.mxu0 %v963
    %1545 = vmatprep.subr.mxu0 0.0
    %1546 = vmatpush1.msra.mxu0 %v962
    %1547 = vmatprep.subr.mxu0 0.0
    %1548 = vmatpush1.msra.mxu0 %v961
    %1549 = vmatprep.subr.mxu0 0.0
    %1550 = vmatpush1.msra.mxu0 %v960
    %1551 = vmatprep.subr.mxu0 0.0
    %1552 = vmatpush1.msra.mxu0 %v959
    %1553 = vmatprep.subr.mxu0 0.0
    %1554 = vmatpush1.msra.mxu0 %v958
    %1555 = vmatprep.subr.mxu0 0.0
    %1556 = vmatpush1.msra.mxu0 %v957
    %1557 = vmatprep.subr.mxu0 0.0
    %1558 = vmatpush1.msra.mxu0 %v956
    %1559 = vmatprep.subr.mxu0 0.0
    %1560 = vmatpush1.msra.mxu0 %v955
    %1561 = vmatprep.subr.mxu0 0.0
    %1562 = vmatpush1.msra.mxu0 %v954
    %1563 = vmatprep.subr.mxu0 0.0
    %1564 = vmatpush1.msra.mxu0 %v953
    %1565 = vmatprep.subr.mxu0 0.0
    %1566 = vmatpush1.msra.mxu0 %v952
    %1567 = vmatprep.subr.mxu0 0.0
    %1568 = vmatpush1.msra.mxu0 %v951
    %1569 = vmatprep.subr.mxu0 0.0
    %1570 = vmatpush2.msra.mxu0 0.0
    %1571 = vmatprep.subr.mxu0 0.0
    %1572 = vmatpush2.msra.mxu0 0.0
    %1573 = vmatprep.subr.mxu0 0.0
    %1574 = vmatpush2.msra.mxu0 0.0
    %1575 = vmatprep.subr.mxu0 0.0
    %1576 = vmatpush2.msra.mxu0 0.0
    %1577 = vmatprep.subr.mxu0 0.0
    %1578 = vmatpush2.msra.mxu0 0.0
    %1579 = vmatprep.subr.mxu0 0.0
    %1580 = vmatpush2.msra.mxu0 0.0
    %1581 = vmatprep.subr.mxu0 0.0
    %1582 = vmatpush2.msra.mxu0 0.0
    %1583 = vmatprep.subr.mxu0 0.0
    %1584 = vmatpush2.msra.mxu0 0.0
    %1585 = vmatprep.subr.mxu0 0.0
    %1586 = vmatpush2.msra.mxu0 0.0
    %1587 = vmatprep.subr.mxu0 0.0
    %1588 = vmatpush2.msra.mxu0 0.0
    %1589 = vmatprep.subr.mxu0 0.0
    %1590 = vmatpush2.msra.mxu0 0.0
    %1591 = vmatprep.subr.mxu0 0.0
    %1592 = vmatpush2.msra.mxu0 0.0
    %1593 = vmatprep.subr.mxu0 0.0
    %1594 = vmatpush2.msra.mxu0 0.0
    %1595 = vmatprep.subr.mxu0 0.0
    %1596 = vmatpush2.msra.mxu0 0.0
    %1597 = vmatprep.subr.mxu0 0.0
    %1598 = vmatpush2.msra.mxu0 0.0
    %1599 = vmatprep.subr.mxu0 0.0
    %1600 = vmatpush2.msra.mxu0 0.0
    %1601 = vmatprep.mubr.f32.mxu0 0.0
    %1602 = vmatmul.mubr.f32.gmra.mxu0 %v1534
    %v1603 = vpop.f32.mrf.mxu0
    %v1604 = vadd.f32 0.0, %v1603
    %v1605 = vpop.f32.mrf.mxu0
    %1606 = vdwg.mxu0
    %v1607 = vadd.f32 %v1536, %v1604
    %v1608 = vmul.f32 %v1607, %v53
    %v1609 = vtanh.pop %v1608
    %v1610 = vmul.f32 %v1609, %v53
    %v1611 = vadd.f32 %v1610, %v54
    %1612 = vrot.lane.b32.xlu0 %v1611, 64
    %v1613 = vpop.permute.xlu0 %1612
    %v1614 = vmul.f32 %v1611, %v1613
    %1615 = vrot.lane.b32.xlu0 %v1614, 32
    %v1616 = vpop.permute.xlu0 %1615
    %v1617 = vsel %vm52, %v1611, %v1613
    %v1618 = vsel %vm52, %v1613, %v1611
    %v1619 = vmul.f32 %v1617, %v1532
    %v1620 = vadd.f32 %v1619, %v1616
    %v1621 = vtanh.pop %v1620
    %v1622 = vmul.f32 %v1618, %v1621
    %1623 = vst [vmem:[%s751] sm:$0xff] %v1622
    %v1624 = vld [vmem:[%s753] sm:$0xff]
    %1625 = vmatprep.subr.mxu0 0.0
    %1626 = vmatpush1.msra.mxu0 %v966
    %1627 = vmatprep.subr.mxu0 0.0
    %1628 = vmatpush1.msra.mxu0 %v965
    %1629 = vmatprep.subr.mxu0 0.0
    %1630 = vmatpush1.msra.mxu0 %v964
    %1631 = vmatprep.subr.mxu0 0.0
    %1632 = vmatpush1.msra.mxu0 %v963
    %1633 = vmatprep.subr.mxu0 0.0
    %1634 = vmatpush1.msra.mxu0 %v962
    %1635 = vmatprep.subr.mxu0 0.0
    %1636 = vmatpush1.msra.mxu0 %v961
    %1637 = vmatprep.subr.mxu0 0.0
    %1638 = vmatpush1.msra.mxu0 %v960
    %1639 = vmatprep.subr.mxu0 0.0
    %1640 = vmatpush1.msra.mxu0 %v959
    %1641 = vmatprep.subr.mxu0 0.0
    %1642 = vmatpush1.msra.mxu0 %v958
    %1643 = vmatprep.subr.mxu0 0.0
    %1644 = vmatpush1.msra.mxu0 %v957
    %1645 = vmatprep.subr.mxu0 0.0
    %1646 = vmatpush1.msra.mxu0 %v956
    %1647 = vmatprep.subr.mxu0 0.0
    %1648 = vmatpush1.msra.mxu0 %v955
    %1649 = vmatprep.subr.mxu0 0.0
    %1650 = vmatpush1.msra.mxu0 %v954
    %1651 = vmatprep.subr.mxu0 0.0
    %1652 = vmatpush1.msra.mxu0 %v953
    %1653 = vmatprep.subr.mxu0 0.0
    %1654 = vmatpush1.msra.mxu0 %v952
    %1655 = vmatprep.subr.mxu0 0.0
    %1656 = vmatpush1.msra.mxu0 %v951
    %1657 = vmatprep.subr.mxu0 0.0
    %1658 = vmatpush2.msra.mxu0 0.0
    %1659 = vmatprep.subr.mxu0 0.0
    %1660 = vmatpush2.msra.mxu0 0.0
    %1661 = vmatprep.subr.mxu0 0.0
    %1662 = vmatpush2.msra.mxu0 0.0
    %1663 = vmatprep.subr.mxu0 0.0
    %1664 = vmatpush2.msra.mxu0 0.0
    %1665 = vmatprep.subr.mxu0 0.0
    %1666 = vmatpush2.msra.mxu0 0.0
    %1667 = vmatprep.subr.mxu0 0.0
    %1668 = vmatpush2.msra.mxu0 0.0
    %1669 = vmatprep.subr.mxu0 0.0
    %1670 = vmatpush2.msra.mxu0 0.0
    %1671 = vmatprep.subr.mxu0 0.0
    %1672 = vmatpush2.msra.mxu0 0.0
    %1673 = vmatprep.subr.mxu0 0.0
    %1674 = vmatpush2.msra.mxu0 0.0
    %1675 = vmatprep.subr.mxu0 0.0
    %1676 = vmatpush2.msra.mxu0 0.0
    %1677 = vmatprep.subr.mxu0 0.0
    %1678 = vmatpush2.msra.mxu0 0.0
    %1679 = vmatprep.subr.mxu0 0.0
    %1680 = vmatpush2.msra.mxu0 0.0
    %1681 = vmatprep.subr.mxu0 0.0
    %1682 = vmatpush2.msra.mxu0 0.0
    %1683 = vmatprep.subr.mxu0 0.0
    %1684 = vmatpush2.msra.mxu0 0.0
    %1685 = vmatprep.subr.mxu0 0.0
    %1686 = vmatpush2.msra.mxu0 0.0
    %1687 = vmatprep.subr.mxu0 0.0
    %1688 = vmatpush2.msra.mxu0 0.0
    %1689 = vmatprep.mubr.f32.mxu0 0.0
    %1690 = vmatmul.mubr.f32.gmra.mxu0 %v1622
    %v1691 = vpop.f32.mrf.mxu0
    %v1692 = vadd.f32 0.0, %v1691
    %v1693 = vpop.f32.mrf.mxu0
    %1694 = vdwg.mxu0
    %v1695 = vadd.f32 %v1624, %v1692
    %v1696 = vmul.f32 %v1695, %v53
    %v1697 = vtanh.pop %v1696
    %v1698 = vmul.f32 %v1697, %v53
    %v1699 = vadd.f32 %v1698, %v54
    %1700 = vrot.lane.b32.xlu0 %v1699, 64
    %v1701 = vpop.permute.xlu0 %1700
    %v1702 = vmul.f32 %v1699, %v1701
    %1703 = vrot.lane.b32.xlu0 %v1702, 32
    %v1704 = vpop.permute.xlu0 %1703
    %v1705 = vsel %vm52, %v1699, %v1701
    %v1706 = vsel %vm52, %v1701, %v1699
    %v1707 = vmul.f32 %v1705, %v1620
    %v1708 = vadd.f32 %v1707, %v1704
    %v1709 = vtanh.pop %v1708
    %v1710 = vmul.f32 %v1706, %v1709
    %1711 = vst [vmem:[%s841] sm:$0xff] %v1710
    %v1712 = vld [vmem:[%s843] sm:$0xff]
    %1713 = vmatprep.subr.mxu0 0.0
    %1714 = vmatpush1.msra.mxu0 %v966
    %1715 = vmatprep.subr.mxu0 0.0
    %1716 = vmatpush1.msra.mxu0 %v965
    %1717 = vmatprep.subr.mxu0 0.0
    %1718 = vmatpush1.msra.mxu0 %v964
    %1719 = vmatprep.subr.mxu0 0.0
    %1720 = vmatpush1.msra.mxu0 %v963
    %1721 = vmatprep.subr.mxu0 0.0
    %1722 = vmatpush1.msra.mxu0 %v962
    %1723 = vmatprep.subr.mxu0 0.0
    %1724 = vmatpush1.msra.mxu0 %v961
    %1725 = vmatprep.subr.mxu0 0.0
    %1726 = vmatpush1.msra.mxu0 %v960
    %1727 = vmatprep.subr.mxu0 0.0
    %1728 = vmatpush1.msra.mxu0 %v959
    %1729 = vmatprep.subr.mxu0 0.0
    %1730 = vmatpush1.msra.mxu0 %v958
    %1731 = vmatprep.subr.mxu0 0.0
    %1732 = vmatpush1.msra.mxu0 %v957
    %1733 = vmatprep.subr.mxu0 0.0
    %1734 = vmatpush1.msra.mxu0 %v956
    %1735 = vmatprep.subr.mxu0 0.0
    %1736 = vmatpush1.msra.mxu0 %v955
    %1737 = vmatprep.subr.mxu0 0.0
    %1738 = vmatpush1.msra.mxu0 %v954
    %1739 = vmatprep.subr.mxu0 0.0
    %1740 = vmatpush1.msra.mxu0 %v953
    %1741 = vmatprep.subr.mxu0 0.0
    %1742 = vmatpush1.msra.mxu0 %v952
    %1743 = vmatprep.subr.mxu0 0.0
    %1744 = vmatpush1.msra.mxu0 %v951
    %1745 = vmatprep.subr.mxu0 0.0
    %1746 = vmatpush2.msra.mxu0 0.0
    %1747 = vmatprep.subr.mxu0 0.0
    %1748 = vmatpush2.msra.mxu0 0.0
    %1749 = vmatprep.subr.mxu0 0.0
    %1750 = vmatpush2.msra.mxu0 0.0
    %1751 = vmatprep.subr.mxu0 0.0
    %1752 = vmatpush2.msra.mxu0 0.0
    %1753 = vmatprep.subr.mxu0 0.0
    %1754 = vmatpush2.msra.mxu0 0.0
    %1755 = vmatprep.subr.mxu0 0.0
    %1756 = vmatpush2.msra.mxu0 0.0
    %1757 = vmatprep.subr.mxu0 0.0
    %1758 = vmatpush2.msra.mxu0 0.0
    %1759 = vmatprep.subr.mxu0 0.0
    %1760 = vmatpush2.msra.mxu0 0.0
    %1761 = vmatprep.subr.mxu0 0.0
    %1762 = vmatpush2.msra.mxu0 0.0
    %1763 = vmatprep.subr.mxu0 0.0
    %1764 = vmatpush2.msra.mxu0 0.0
    %1765 = vmatprep.subr.mxu0 0.0
    %1766 = vmatpush2.msra.mxu0 0.0
    %1767 = vmatprep.subr.mxu0 0.0
    %1768 = vmatpush2.msra.mxu0 0.0
    %1769 = vmatprep.subr.mxu0 0.0
    %1770 = vmatpush2.msra.mxu0 0.0
    %1771 = vmatprep.subr.mxu0 0.0
    %1772 = vmatpush2.msra.mxu0 0.0
    %1773 = vmatprep.subr.mxu0 0.0
    %1774 = vmatpush2.msra.mxu0 0.0
    %1775 = vmatprep.subr.mxu0 0.0
    %1776 = vmatpush2.msra.mxu0 0.0
    %1777 = vmatprep.mubr.f32.mxu0 0.0
    %1778 = vmatmul.mubr.f32.gmra.mxu0 %v1710
    %v1779 = vpop.f32.mrf.mxu0
    %v1780 = vadd.f32 0.0, %v1779
    %v1781 = vpop.f32.mrf.mxu0
    %1782 = vdwg.mxu0
    %v1783 = vadd.f32 %v1712, %v1780
    %v1784 = vmul.f32 %v1783, %v53
    %v1785 = vtanh.pop %v1784
    %v1786 = vmul.f32 %v1785, %v53
    %v1787 = vadd.f32 %v1786, %v54
    %1788 = vrot.lane.b32.xlu0 %v1787, 64
    %v1789 = vpop.permute.xlu0 %1788
    %v1790 = vmul.f32 %v1787, %v1789
    %1791 = vrot.lane.b32.xlu0 %v1790, 32
    %v1792 = vpop.permute.xlu0 %1791
    %v1793 = vsel %vm52, %v1787, %v1789
    %v1794 = vsel %vm52, %v1789, %v1787
    %v1795 = vmul.f32 %v1793, %v1708
    %v1796 = vadd.f32 %v1795, %v1792
    %v1797 = vtanh.pop %v1796
    %v1798 = vmul.f32 %v1794, %v1797
    %1799 = vst [vmem:[%s931] sm:$0xff] %v1798
    %v1800 = vld [vmem:[#allocation3] sm:$0xff]
    %v1801 = vld [vmem:[#allocation3 + $0x8] sm:$0xff]
    %v1802 = vld [vmem:[#allocation3 + $0x10] sm:$0xff]
    %v1803 = vld [vmem:[#allocation3 + $0x18] sm:$0xff]
    %v1804 = vld [vmem:[#allocation3 + $0x20] sm:$0xff]
    %v1805 = vld [vmem:[#allocation3 + $0x28] sm:$0xff]
    %v1806 = vld [vmem:[#allocation3 + $0x30] sm:$0xff]
    %v1807 = vld [vmem:[#allocation3 + $0x38] sm:$0xff]
    %v1808 = vld [vmem:[%s0] sm:$0xff]
    %v1809 = vld [vmem:[%s0 + $0x8] sm:$0xff]
    %v1810 = vld [vmem:[%s0 + $0x10] sm:$0xff]
    %v1811 = vld [vmem:[%s0 + $0x18] sm:$0xff]
    %v1812 = vld [vmem:[%s0 + $0x20] sm:$0xff]
    %v1813 = vld [vmem:[%s0 + $0x28] sm:$0xff]
    %v1814 = vld [vmem:[%s0 + $0x30] sm:$0xff]
    %v1815 = vld [vmem:[%s0 + $0x38] sm:$0xff]
    %v1816 = vadd.f32 %v1800, %v1808
    %v1817 = vadd.f32 %v1801, %v1809
    %v1818 = vadd.f32 %v1802, %v1810
    %v1819 = vadd.f32 %v1803, %v1811
    %v1820 = vadd.f32 %v1804, %v1812
    %v1821 = vadd.f32 %v1805, %v1813
    %v1822 = vadd.f32 %v1806, %v1814
    %v1823 = vadd.f32 %v1807, %v1815
    %1824 = vst [vmem:[%s4] sm:$0xff] %v1816
    %1825 = vst [vmem:[%s4 + $0x8] sm:$0xff] %v1817
    %1826 = vst [vmem:[%s4 + $0x10] sm:$0xff] %v1818
    %1827 = vst [vmem:[%s4 + $0x18] sm:$0xff] %v1819
    %1828 = vst [vmem:[%s4 + $0x20] sm:$0xff] %v1820
    %1829 = vst [vmem:[%s4 + $0x28] sm:$0xff] %v1821
    %1830 = vst [vmem:[%s4 + $0x30] sm:$0xff] %v1822
    %1831 = vst [vmem:[%s4 + $0x38] sm:$0xff] %v1823
    // Predicated region
    $region26: #{slstm_forward.1} parent=1 // pred_check
      _
    $region27: #{slstm_forward.1} parent=1 // pred_check_branch
      %1833 = sbr.rel (0) target = $region29
    $region28: #{slstm_forward.1} parent=1 // pred_region
      _
    $region29: #{slstm_forward.1} parent=1 // pred_fallthru
      _
    // Predicated region
    $region30: #{slstm_forward.1} parent=1 // pred_check
      _
    $region31: #{slstm_forward.1} parent=1 // pred_check_branch
      %1835 = sbr.rel (0) target = $region33
    $region32: #{slstm_forward.1} parent=1 // pred_region
      _
    $region33: #{slstm_forward.1} parent=1 // pred_fallthru
      _
    %1836 = vsyncpa [#allocation5], 1
    %1837 = vsyncpa [#allocation7], 1

</llo_original>
